<compile_context>
chip_gen: v7x
topology: tpu7x:2x2x1
jax: 0.10.0
libtpu: 0.0.40
codegen_flags: <defaults>
</compile_context>

<pallas_src>
import numpy as np
import jax
import jax.numpy as jnp
from jax import lax
from jax.experimental import pallas as pl
from jax.experimental.pallas import tpu as pltpu

# ---------------- model configuration (small, consistent with the module) ---
IN_SHAPE = (4, 16)
OUT_SHAPE = (8,)
IN_DIM = int(np.prod(IN_SHAPE))      # 64
OUT_DIM = int(np.prod(OUT_SHAPE))    # 8
LINEAR_DIM = 128
C1, C2, K, PAD = 64, 32, 5, 2
EPS = 1e-5

POOL_IN = C2 * IN_DIM                # flattened length fed to AdaptiveAvgPool1d
POOL_W = POOL_IN // LINEAR_DIM       # pooling window (16)
PER_CH = IN_DIM // POOL_W            # pooled outputs per conv channel (4)
# TODO(synk): AdaptiveAvgPool1d with (32*in_dim) % linear_dim != 0 uses
# variable-width windows; only the evenly-divisible case is implemented here.
assert POOL_IN % LINEAR_DIM == 0 and IN_DIM % POOL_W == 0 and C2 * PER_CH == LINEAR_DIM


# ------------------------------ Pallas kernel -------------------------------
def mysimplenet_kernel(x_ref, mavg_ref, g1t_ref, b1t_ref, tcat_ref,
                       w1_ref, bc1_ref, w2r_ref, bc2_ref, pb_ref, qt_ref,
                       g2_ref, b2_ref, wl1_ref, bl1_ref, wl2_ref, bl2_ref,
                       wl3_ref, bl3_ref, out_ref):
    f32 = jnp.float32
    w_flat = x_ref.shape[-1]              # TN * IN_DIM (batch fused into lanes)
    tn = w_flat // IN_DIM

    xf = x_ref[...]                                             # (1, W)

    # --- LayerNorm(in_dim), per sample, in the lane-fused layout -------------
    # mavg is a block-diagonal per-sample averaging matrix -> per-lane mean.
    mavg = mavg_ref[...]
    mu = jnp.dot(xf, mavg, preferred_element_type=f32)
    cen = xf - mu
    var = jnp.dot(cen * cen, mavg, preferred_element_type=f32)
    xh = cen * lax.rsqrt(var + EPS) * g1t_ref[...] + b1t_ref[...]

    # --- tap shifts via one precomputed shift matrix --------------------------
    # (a @ tcat)[:, k*W:(k+1)*W] == a shifted by (k - PAD) along the length,
    # with zeros at sample boundaries (the matrix never mixes samples).
    tcat = tcat_ref[...]                                        # (W, K*W)

    # Conv1d(1, C1, K, pad=2) + ReLU: (K, W) im2col, single (C1,K)x(K,W) dot.
    xs_cat = jnp.dot(xh, tcat, preferred_element_type=f32)      # (1, K*W)
    xs = jnp.concatenate(
        [xs_cat[:, k * w_flat:(k + 1) * w_flat] for k in range(K)], axis=0)
    h1 = jnp.maximum(
        jnp.dot(w1_ref[...], xs, preferred_element_type=f32) + bc1_ref[...], 0.0)

    # Conv1d(C1, C2, K, pad=2): (K*C1, W) im2col stack, single fused matmul
    # with contraction dim 320.
    h1s_cat = jnp.dot(h1, tcat, preferred_element_type=f32)     # (C1, K*W)
    h1s = jnp.concatenate(
        [h1s_cat[:, k * w_flat:(k + 1) * w_flat] for k in range(K)], axis=0)
    acc2 = jnp.dot(w2r_ref[...], h1s, preferred_element_type=f32) + bc2_ref[...]

    # Flatten(1) + AdaptiveAvgPool1d(LINEAR_DIM): pooling matmul + masked
    # sublane reduction (channel selection).
    r = jnp.dot(acc2, pb_ref[...], preferred_element_type=f32)  # (C2, TN*128)
    pooled_flat = jnp.sum(qt_ref[...] * r, axis=0, keepdims=True)

    # lane-fused -> batch-on-sublanes: TN 128-aligned lane slices.
    pooled = jnp.concatenate(
        [pooled_flat[:, n * LINEAR_DIM:(n + 1) * LINEAR_DIM] for n in range(tn)],
        axis=0)                                                 # (TN, 128)

    # --- LayerNorm(linear_dim) ------------------------------------------------
    mu2 = jnp.mean(pooled, axis=-1, keepdims=True)
    cen2 = pooled - mu2
    var2 = jnp.mean(cen2 * cen2, axis=-1, keepdims=True)
    y = cen2 * lax.rsqrt(var2 + EPS) * g2_ref[...] + b2_ref[...]

    # --- MLP head (default single-pass MXU precision) -------------------------
    y = jnp.maximum(jnp.dot(y, wl1_ref[...], preferred_element_type=f32)
                    + bl1_ref[...], 0.0)
    y = jnp.maximum(jnp.dot(y, wl2_ref[...], preferred_element_type=f32)
                    + bl2_ref[...], 0.0)
    z = jnp.dot(y, wl3_ref[...], preferred_element_type=f32) + bl3_ref[...]

    # softmax over the first OUT_DIM lanes (wl3/bl3 are zero-padded to 128 so
    # the store stays lane-dense; the wrapper slices [:, :OUT_DIM]).
    lane = lax.broadcasted_iota(jnp.int32, (1, LINEAR_DIM), 1)
    valid = lane < OUT_DIM
    zm = jnp.where(valid, z, jnp.float32(-1e30))
    zmax = jnp.max(zm, axis=-1, keepdims=True)
    ez = jnp.where(valid, jnp.exp(zm - zmax), 0.0)
    out_ref[...] = (ez / jnp.sum(ez, axis=-1, keepdims=True)).astype(out_ref.dtype)


# ------------------------------ operand preparation --------------------------
def _conv_pool_constants(tn):
    """Shift / mean / pooling matrices for a tn-sample lane-fused tile."""
    w_flat = tn * IN_DIM
    q = np.arange(w_flat)[:, None]                 # source flat position
    p = np.arange(w_flat)[None, :]                 # destination flat position
    same = (q // IN_DIM) == (p // IN_DIM)          # stay within one sample
    # K shift matrices (shift by k - PAD, zero fill) concatenated along lanes.
    tcat = np.concatenate(
        [((q == p + (k - PAD)) & same).astype(np.float32) for k in range(K)],
        axis=1)                                    # (W, K*W)
    mavg = same.astype(np.float32) / IN_DIM        # block-diag per-sample mean

    m = np.arange(tn * LINEAR_DIM)[None, :]
    pb = (((q // IN_DIM) == (m // LINEAR_DIM)) &
          (((q % IN_DIM) // POOL_W) == ((m % LINEAR_DIM) % PER_CH))
          ).astype(np.float32) / POOL_W            # (W, tn*128)
    qt = (np.arange(C2)[:, None] ==
          ((m % LINEAR_DIM) // PER_CH)).astype(np.float32)   # (C2, tn*128)
    return jnp.asarray(mavg), jnp.asarray(tcat), jnp.asarray(pb), jnp.asarray(qt)


def prepare_operands(params, tn):
    (g1, bn1, w1, bc1, w2, bc2, g2, bn2,
     wl1, bl1, wl2, bl2, wl3, bl3) = params
    mavg, tcat, pb, qt = _conv_pool_constants(tn)
    g1t = jnp.tile(g1, (1, tn))
    b1t = jnp.tile(bn1, (1, tn))
    # w2 (C2, C1, K) -> (C2, K*C1), row order matches the im2col stack (k-major).
    w2r = jnp.transpose(w2, (0, 2, 1)).reshape(C2, K * C1)
    # zero-pad the last linear layer to 128 outputs for lane-dense stores.
    wl3p = jnp.zeros((LINEAR_DIM, LINEAR_DIM), jnp.float32).at[:, :OUT_DIM].set(wl3)
    bl3p = jnp.zeros((1, LINEAR_DIM), jnp.float32).at[:, :OUT_DIM].set(bl3)
    return (mavg, g1t, b1t, tcat, w1, bc1, w2r, bc2, pb, qt,
            g2, bn2, wl1, bl1, wl2, bl2, wl3p, bl3p)


# ------------------------------ wrapper ---------------------------------------
@jax.jit
def mysimplenet_forward(x, params):
    n = x.shape[0]
    tn = max(t for t in (8, 4, 2, 1) if n % t == 0)   # batch tile per grid step
    w_flat = tn * IN_DIM
    ops = prepare_operands(params, tn)

    # x.view(N, 1, in_dim) glue; batch fused into lanes per grid block.
    xf = x.reshape(n, IN_DIM).astype(jnp.float32).reshape(n // tn, 1, w_flat)

    in_specs = [pl.BlockSpec((None, 1, w_flat), lambda i: (i, 0, 0))]
    in_specs += [pl.BlockSpec(op.shape, lambda i: (0, 0)) for op in ops]

    out = pl.pallas_call(
        mysimplenet_kernel,
        grid=(n // tn,),
        in_specs=in_specs,
        out_specs=pl.BlockSpec((None, tn, LINEAR_DIM), lambda i: (i, 0, 0)),
        out_shape=jax.ShapeDtypeStruct((n // tn, tn, LINEAR_DIM), jnp.float32),
        compiler_params=pltpu.CompilerParams(
            dimension_semantics=("parallel",)),
    )(xf, *ops)
    return out.reshape(n, LINEAR_DIM)[:, :OUT_DIM].reshape(n, *OUT_SHAPE)


# ------------------------------ parameters ------------------------------------
def make_params(key):
    ks = jax.random.split(key, 14)

    def rnd(k, shape, scale):
        return scale * jax.random.normal(k, shape, dtype=jnp.float32)

    g1 = 1.0 + rnd(ks[0], (1, IN_DIM), 0.05)
    bn1 = rnd(ks[1], (1, IN_DIM), 0.05)
    w1 = rnd(ks[2], (C1, K), 1.0 / np.sqrt(K))                 # torch (C1, 1, K)
    bc1 = rnd(ks[3], (C1, 1), 0.05)
    w2 = rnd(ks[4], (C2, C1, K), 1.0 / np.sqrt(K * C1))        # torch (C2, C1, K)
    bc2 = rnd(ks[5], (C2, 1), 0.05)
    g2 = 1.0 + rnd(ks[6], (1, LINEAR_DIM), 0.05)
    bn2 = rnd(ks[7], (1, LINEAR_DIM), 0.05)
    wl1 = rnd(ks[8], (LINEAR_DIM, LINEAR_DIM), 1.0 / np.sqrt(LINEAR_DIM))  # (in,out)
    bl1 = rnd(ks[9], (1, LINEAR_DIM), 0.05)
    wl2 = rnd(ks[10], (LINEAR_DIM, LINEAR_DIM), 1.0 / np.sqrt(LINEAR_DIM))
    bl2 = rnd(ks[11], (1, LINEAR_DIM), 0.05)
    wl3 = rnd(ks[12], (LINEAR_DIM, OUT_DIM), 1.0 / np.sqrt(LINEAR_DIM))
    bl3 = rnd(ks[13], (1, OUT_DIM), 0.05)
    return (g1, bn1, w1, bc1, w2, bc2, g2, bn2,
            wl1, bl1, wl2, bl2, wl3, bl3)


# ------------------------------ pure-JAX reference ----------------------------
# Uses the same (default) matmul precision as the kernel so the tolerance
# check compares structure, not MXU rounding mode.
def reference_forward(x, params):
    (g1, bn1, w1, bc1, w2, bc2, g2, bn2,
     wl1, bl1, wl2, bl2, wl3, bl3) = params
    n = x.shape[0]
    xf = x.reshape(n, IN_DIM).astype(jnp.float32)
    mu = xf.mean(-1, keepdims=True)
    var = ((xf - mu) ** 2).mean(-1, keepdims=True)
    xh = (xf - mu) / jnp.sqrt(var + EPS) * g1 + bn1
    z = xh[:, None, :]                                       # NCL (N, 1, L)
    h1 = lax.conv_general_dilated(z, w1.reshape(C1, 1, K), (1,), [(PAD, PAD)],
                                  dimension_numbers=('NCH', 'OIH', 'NCH'))
    h1 = jnp.maximum(h1 + bc1.reshape(1, C1, 1), 0.0)
    h2 = lax.conv_general_dilated(h1, w2, (1,), [(PAD, PAD)],
                                  dimension_numbers=('NCH', 'OIH', 'NCH'))
    h2 = h2 + bc2.reshape(1, C2, 1)
    pooled = h2.reshape(n, POOL_IN).reshape(n, LINEAR_DIM, POOL_W).mean(-1)
    mu2 = pooled.mean(-1, keepdims=True)
    var2 = ((pooled - mu2) ** 2).mean(-1, keepdims=True)
    y = (pooled - mu2) / jnp.sqrt(var2 + EPS) * g2 + bn2
    y = jnp.maximum(jnp.dot(y, wl1) + bl1, 0.0)
    y = jnp.maximum(jnp.dot(y, wl2) + bl2, 0.0)
    zz = jax.nn.softmax(jnp.dot(y, wl3) + bl3, axis=1)
    return zz.reshape(n, *OUT_SHAPE)


if __name__ == "__main__":
    key = jax.random.PRNGKey(0)
    pkey, xkey = jax.random.split(key)
    params = make_params(pkey)
    x = jax.random.normal(xkey, (2, *IN_SHAPE), dtype=jnp.float32)

    out = jax.block_until_ready(mysimplenet_forward(x, params))
    ref = reference_forward(x, params)
    np.testing.assert_allclose(np.asarray(out), np.asarray(ref),
                               rtol=5e-2, atol=5e-3)
    assert out.shape == (2, *OUT_SHAPE)
    print("KERNEL_OK")
</pallas_src>

<mosaic_0001>
module attributes {stable_mosaic.version = 11 : i64} {
  func.func @mysimplenet_kernel(%arg0: i32, %arg1: memref<1x1x128xf32, #tpu.memory_space<vmem>>, %arg2: memref<128x128xf32, #tpu.memory_space<vmem>>, %arg3: memref<1x128xf32, #tpu.memory_space<vmem>>, %arg4: memref<1x128xf32, #tpu.memory_space<vmem>>, %arg5: memref<128x640xf32, #tpu.memory_space<vmem>>, %arg6: memref<64x5xf32, #tpu.memory_space<vmem>>, %arg7: memref<64x1xf32, #tpu.memory_space<vmem>>, %arg8: memref<32x320xf32, #tpu.memory_space<vmem>>, %arg9: memref<32x1xf32, #tpu.memory_space<vmem>>, %arg10: memref<128x256xf32, #tpu.memory_space<vmem>>, %arg11: memref<32x256xf32, #tpu.memory_space<vmem>>, %arg12: memref<1x128xf32, #tpu.memory_space<vmem>>, %arg13: memref<1x128xf32, #tpu.memory_space<vmem>>, %arg14: memref<128x128xf32, #tpu.memory_space<vmem>>, %arg15: memref<1x128xf32, #tpu.memory_space<vmem>>, %arg16: memref<128x128xf32, #tpu.memory_space<vmem>>, %arg17: memref<1x128xf32, #tpu.memory_space<vmem>>, %arg18: memref<128x128xf32, #tpu.memory_space<vmem>>, %arg19: memref<1x128xf32, #tpu.memory_space<vmem>>, %arg20: memref<1x2x128xf32, #tpu.memory_space<vmem>>) attributes {dimension_semantics = [#tpu.dimension_semantics<parallel>], iteration_bounds = array<i64: 1>, scalar_prefetch = 0 : i64, scratch_operands = 0 : i64, tpu.core_type = #tpu.core_type<tc>, window_params = [{transform_indices = @transform_0, window_bounds = array<i64: 1, 1, 128>}, {pipeline_mode = #tpu.pipeline_mode<synchronous>, transform_indices = @transform_1, window_bounds = array<i64: 128, 128>}, {pipeline_mode = #tpu.pipeline_mode<synchronous>, transform_indices = @transform_2, window_bounds = array<i64: 1, 128>}, {pipeline_mode = #tpu.pipeline_mode<synchronous>, transform_indices = @transform_3, window_bounds = array<i64: 1, 128>}, {pipeline_mode = #tpu.pipeline_mode<synchronous>, transform_indices = @transform_4, window_bounds = array<i64: 128, 640>}, {pipeline_mode = #tpu.pipeline_mode<synchronous>, transform_indices = @transform_5, window_bounds = array<i64: 64, 5>}, {pipeline_mode = #tpu.pipeline_mode<synchronous>, transform_indices = @transform_6, window_bounds = array<i64: 64, 1>}, {pipeline_mode = #tpu.pipeline_mode<synchronous>, transform_indices = @transform_7, window_bounds = array<i64: 32, 320>}, {pipeline_mode = #tpu.pipeline_mode<synchronous>, transform_indices = @transform_8, window_bounds = array<i64: 32, 1>}, {pipeline_mode = #tpu.pipeline_mode<synchronous>, transform_indices = @transform_9, window_bounds = array<i64: 128, 256>}, {pipeline_mode = #tpu.pipeline_mode<synchronous>, transform_indices = @transform_10, window_bounds = array<i64: 32, 256>}, {pipeline_mode = #tpu.pipeline_mode<synchronous>, transform_indices = @transform_11, window_bounds = array<i64: 1, 128>}, {pipeline_mode = #tpu.pipeline_mode<synchronous>, transform_indices = @transform_12, window_bounds = array<i64: 1, 128>}, {pipeline_mode = #tpu.pipeline_mode<synchronous>, transform_indices = @transform_13, window_bounds = array<i64: 128, 128>}, {pipeline_mode = #tpu.pipeline_mode<synchronous>, transform_indices = @transform_14, window_bounds = array<i64: 1, 128>}, {pipeline_mode = #tpu.pipeline_mode<synchronous>, transform_indices = @transform_15, window_bounds = array<i64: 128, 128>}, {pipeline_mode = #tpu.pipeline_mode<synchronous>, transform_indices = @transform_16, window_bounds = array<i64: 1, 128>}, {pipeline_mode = #tpu.pipeline_mode<synchronous>, transform_indices = @transform_17, window_bounds = array<i64: 128, 128>}, {pipeline_mode = #tpu.pipeline_mode<synchronous>, transform_indices = @transform_18, window_bounds = array<i64: 1, 128>}, {transform_indices = @transform_19, window_bounds = array<i64: 1, 2, 128>}]} {
    %c0 = arith.constant 0 : index
    %c0_0 = arith.constant 0 : index
    %c0_1 = arith.constant 0 : index
    %0 = vector.load %arg1[%c0, %c0_0, %c0_1] : memref<1x1x128xf32, #tpu.memory_space<vmem>>, vector<1x1x128xf32>
    %1 = vector.shape_cast %0 : vector<1x1x128xf32> to vector<1x128xf32>
    %c0_2 = arith.constant 0 : index
    %c0_3 = arith.constant 0 : index
    %2 = vector.load %arg2[%c0_2, %c0_3] : memref<128x128xf32, #tpu.memory_space<vmem>>, vector<128x128xf32>
    %cst = arith.constant dense<0.000000e+00> : vector<1x128xf32>
    %3 = tpu.matmul %1, %2, %cst {dimension_numbers = #tpu.dot_dimension_numbers<[1], [0], [0], [1], [0, 0, 1, 1], [], []>} : vector<1x128xf32>, vector<128x128xf32>, vector<1x128xf32> -> vector<1x128xf32>
    %4 = arith.subf %1, %3 : vector<1x128xf32>
    %5 = arith.mulf %4, %4 : vector<1x128xf32>
    %cst_4 = arith.constant dense<0.000000e+00> : vector<1x128xf32>
    %6 = tpu.matmul %5, %2, %cst_4 {dimension_numbers = #tpu.dot_dimension_numbers<[1], [0], [0], [1], [0, 0, 1, 1], [], []>} : vector<1x128xf32>, vector<128x128xf32>, vector<1x128xf32> -> vector<1x128xf32>
    %cst_5 = arith.constant 9.99999974E-6 : f32
    %7 = vector.broadcast %cst_5 : f32 to vector<1x128xf32>
    %8 = arith.addf %6, %7 : vector<1x128xf32>
    %9 = math.rsqrt %8 : vector<1x128xf32>
    %10 = arith.mulf %4, %9 : vector<1x128xf32>
    %c0_6 = arith.constant 0 : index
    %c0_7 = arith.constant 0 : index
    %11 = vector.load %arg3[%c0_6, %c0_7] : memref<1x128xf32, #tpu.memory_space<vmem>>, vector<1x128xf32>
    %12 = arith.mulf %10, %11 : vector<1x128xf32>
    %c0_8 = arith.constant 0 : index
    %c0_9 = arith.constant 0 : index
    %13 = vector.load %arg4[%c0_8, %c0_9] : memref<1x128xf32, #tpu.memory_space<vmem>>, vector<1x128xf32>
    %14 = arith.addf %12, %13 : vector<1x128xf32>
    %c0_10 = arith.constant 0 : index
    %c0_11 = arith.constant 0 : index
    %15 = vector.load %arg5[%c0_10, %c0_11] : memref<128x640xf32, #tpu.memory_space<vmem>>, vector<128x640xf32>
    %cst_12 = arith.constant dense<0.000000e+00> : vector<1x640xf32>
    %16 = tpu.matmul %14, %15, %cst_12 {dimension_numbers = #tpu.dot_dimension_numbers<[1], [0], [0], [1], [0, 0, 1, 1], [], []>} : vector<1x128xf32>, vector<128x640xf32>, vector<1x640xf32> -> vector<1x640xf32>
    %17 = vector.extract_strided_slice %16 {offsets = [0, 0], sizes = [1, 128], strides = [1, 1]} : vector<1x640xf32> to vector<1x128xf32>
    %18 = vector.extract_strided_slice %16 {offsets = [0, 128], sizes = [1, 128], strides = [1, 1]} : vector<1x640xf32> to vector<1x128xf32>
    %19 = vector.extract_strided_slice %16 {offsets = [0, 256], sizes = [1, 128], strides = [1, 1]} : vector<1x640xf32> to vector<1x128xf32>
    %20 = vector.extract_strided_slice %16 {offsets = [0, 384], sizes = [1, 128], strides = [1, 1]} : vector<1x640xf32> to vector<1x128xf32>
    %21 = vector.extract_strided_slice %16 {offsets = [0, 512], sizes = [1, 128], strides = [1, 1]} : vector<1x640xf32> to vector<1x128xf32>
    %22 = tpu.concatenate %17, %18, %19, %20, %21 in 0 : vector<1x128xf32>, vector<1x128xf32>, vector<1x128xf32>, vector<1x128xf32>, vector<1x128xf32> -> vector<5x128xf32>
    %c0_13 = arith.constant 0 : index
    %c0_14 = arith.constant 0 : index
    %23 = vector.load %arg6[%c0_13, %c0_14] : memref<64x5xf32, #tpu.memory_space<vmem>>, vector<64x5xf32>
    %cst_15 = arith.constant dense<0.000000e+00> : vector<64x128xf32>
    %24 = tpu.matmul %23, %22, %cst_15 {dimension_numbers = #tpu.dot_dimension_numbers<[1], [0], [0], [1], [0, 0, 1, 1], [], []>} : vector<64x5xf32>, vector<5x128xf32>, vector<64x128xf32> -> vector<64x128xf32>
    %c0_16 = arith.constant 0 : index
    %c0_17 = arith.constant 0 : index
    %25 = vector.load %arg7[%c0_16, %c0_17] : memref<64x1xf32, #tpu.memory_space<vmem>>, vector<64x1xf32>
    %26 = vector.broadcast %25 : vector<64x1xf32> to vector<64x128xf32>
    %27 = arith.addf %24, %26 : vector<64x128xf32>
    %cst_18 = arith.constant 0.000000e+00 : f32
    %28 = vector.broadcast %cst_18 : f32 to vector<64x128xf32>
    %29 = arith.maximumf %27, %28 : vector<64x128xf32>
    %cst_19 = arith.constant dense<0.000000e+00> : vector<64x640xf32>
    %30 = tpu.matmul %29, %15, %cst_19 {dimension_numbers = #tpu.dot_dimension_numbers<[1], [0], [0], [1], [0, 0, 1, 1], [], []>} : vector<64x128xf32>, vector<128x640xf32>, vector<64x640xf32> -> vector<64x640xf32>
    %31 = vector.extract_strided_slice %30 {offsets = [0, 0], sizes = [64, 128], strides = [1, 1]} : vector<64x640xf32> to vector<64x128xf32>
    %32 = vector.extract_strided_slice %30 {offsets = [0, 128], sizes = [64, 128], strides = [1, 1]} : vector<64x640xf32> to vector<64x128xf32>
    %33 = vector.extract_strided_slice %30 {offsets = [0, 256], sizes = [64, 128], strides = [1, 1]} : vector<64x640xf32> to vector<64x128xf32>
    %34 = vector.extract_strided_slice %30 {offsets = [0, 384], sizes = [64, 128], strides = [1, 1]} : vector<64x640xf32> to vector<64x128xf32>
    %35 = vector.extract_strided_slice %30 {offsets = [0, 512], sizes = [64, 128], strides = [1, 1]} : vector<64x640xf32> to vector<64x128xf32>
    %36 = tpu.concatenate %31, %32, %33, %34, %35 in 0 : vector<64x128xf32>, vector<64x128xf32>, vector<64x128xf32>, vector<64x128xf32>, vector<64x128xf32> -> vector<320x128xf32>
    %c0_20 = arith.constant 0 : index
    %c0_21 = arith.constant 0 : index
    %37 = vector.load %arg8[%c0_20, %c0_21] : memref<32x320xf32, #tpu.memory_space<vmem>>, vector<32x320xf32>
    %cst_22 = arith.constant dense<0.000000e+00> : vector<32x128xf32>
    %38 = tpu.matmul %37, %36, %cst_22 {dimension_numbers = #tpu.dot_dimension_numbers<[1], [0], [0], [1], [0, 0, 1, 1], [], []>} : vector<32x320xf32>, vector<320x128xf32>, vector<32x128xf32> -> vector<32x128xf32>
    %c0_23 = arith.constant 0 : index
    %c0_24 = arith.constant 0 : index
    %39 = vector.load %arg9[%c0_23, %c0_24] : memref<32x1xf32, #tpu.memory_space<vmem>>, vector<32x1xf32>
    %40 = vector.broadcast %39 : vector<32x1xf32> to vector<32x128xf32>
    %41 = arith.addf %38, %40 : vector<32x128xf32>
    %c0_25 = arith.constant 0 : index
    %c0_26 = arith.constant 0 : index
    %42 = vector.load %arg10[%c0_25, %c0_26] : memref<128x256xf32, #tpu.memory_space<vmem>>, vector<128x256xf32>
    %cst_27 = arith.constant dense<0.000000e+00> : vector<32x256xf32>
    %43 = tpu.matmul %41, %42, %cst_27 {dimension_numbers = #tpu.dot_dimension_numbers<[1], [0], [0], [1], [0, 0, 1, 1], [], []>} : vector<32x128xf32>, vector<128x256xf32>, vector<32x256xf32> -> vector<32x256xf32>
    %c0_28 = arith.constant 0 : index
    %c0_29 = arith.constant 0 : index
    %44 = vector.load %arg11[%c0_28, %c0_29] : memref<32x256xf32, #tpu.memory_space<vmem>>, vector<32x256xf32>
    %45 = arith.mulf %44, %43 : vector<32x256xf32>
    %cst_30 = arith.constant dense<0.000000e+00> : vector<256xf32>
    %46 = vector.multi_reduction <add>, %45, %cst_30 [0] : vector<32x256xf32> to vector<256xf32>
    %47 = vector.shape_cast %46 : vector<256xf32> to vector<1x256xf32>
    %48 = vector.extract_strided_slice %47 {offsets = [0, 0], sizes = [1, 128], strides = [1, 1]} : vector<1x256xf32> to vector<1x128xf32>
    %49 = vector.extract_strided_slice %47 {offsets = [0, 128], sizes = [1, 128], strides = [1, 1]} : vector<1x256xf32> to vector<1x128xf32>
    %50 = tpu.concatenate %48, %49 in 0 : vector<1x128xf32>, vector<1x128xf32> -> vector<2x128xf32>
    %cst_31 = arith.constant dense<0.000000e+00> : vector<2xf32>
    %51 = vector.multi_reduction <add>, %50, %cst_31 [1] : vector<2x128xf32> to vector<2xf32>
    %52 = vector.shape_cast %51 : vector<2xf32> to vector<2x1xf32>
    %cst_32 = arith.constant 1.280000e+02 : f32
    %53 = vector.broadcast %cst_32 : f32 to vector<2x1xf32>
    %54 = arith.divf %52, %53 : vector<2x1xf32>
    %55 = vector.broadcast %54 : vector<2x1xf32> to vector<2x128xf32>
    %56 = arith.subf %50, %55 : vector<2x128xf32>
    %57 = arith.mulf %56, %56 : vector<2x128xf32>
    %cst_33 = arith.constant dense<0.000000e+00> : vector<2xf32>
    %58 = vector.multi_reduction <add>, %57, %cst_33 [1] : vector<2x128xf32> to vector<2xf32>
    %59 = vector.shape_cast %58 : vector<2xf32> to vector<2x1xf32>
    %cst_34 = arith.constant 1.280000e+02 : f32
    %60 = vector.broadcast %cst_34 : f32 to vector<2x1xf32>
    %61 = arith.divf %59, %60 : vector<2x1xf32>
    %cst_35 = arith.constant 9.99999974E-6 : f32
    %62 = vector.broadcast %cst_35 : f32 to vector<2x1xf32>
    %63 = arith.addf %61, %62 : vector<2x1xf32>
    %64 = math.rsqrt %63 : vector<2x1xf32>
    %65 = vector.broadcast %64 : vector<2x1xf32> to vector<2x128xf32>
    %66 = arith.mulf %56, %65 : vector<2x128xf32>
    %c0_36 = arith.constant 0 : index
    %c0_37 = arith.constant 0 : index
    %67 = vector.load %arg12[%c0_36, %c0_37] : memref<1x128xf32, #tpu.memory_space<vmem>>, vector<1x128xf32>
    %68 = vector.broadcast %67 : vector<1x128xf32> to vector<2x128xf32>
    %69 = arith.mulf %66, %68 : vector<2x128xf32>
    %c0_38 = arith.constant 0 : index
    %c0_39 = arith.constant 0 : index
    %70 = vector.load %arg13[%c0_38, %c0_39] : memref<1x128xf32, #tpu.memory_space<vmem>>, vector<1x128xf32>
    %71 = vector.broadcast %70 : vector<1x128xf32> to vector<2x128xf32>
    %72 = arith.addf %69, %71 : vector<2x128xf32>
    %c0_40 = arith.constant 0 : index
    %c0_41 = arith.constant 0 : index
    %73 = vector.load %arg14[%c0_40, %c0_41] : memref<128x128xf32, #tpu.memory_space<vmem>>, vector<128x128xf32>
    %cst_42 = arith.constant dense<0.000000e+00> : vector<2x128xf32>
    %74 = tpu.matmul %72, %73, %cst_42 {dimension_numbers = #tpu.dot_dimension_numbers<[1], [0], [0], [1], [0, 0, 1, 1], [], []>} : vector<2x128xf32>, vector<128x128xf32>, vector<2x128xf32> -> vector<2x128xf32>
    %c0_43 = arith.constant 0 : index
    %c0_44 = arith.constant 0 : index
    %75 = vector.load %arg15[%c0_43, %c0_44] : memref<1x128xf32, #tpu.memory_space<vmem>>, vector<1x128xf32>
    %76 = vector.broadcast %75 : vector<1x128xf32> to vector<2x128xf32>
    %77 = arith.addf %74, %76 : vector<2x128xf32>
    %cst_45 = arith.constant 0.000000e+00 : f32
    %78 = vector.broadcast %cst_45 : f32 to vector<2x128xf32>
    %79 = arith.maximumf %77, %78 : vector<2x128xf32>
    %c0_46 = arith.constant 0 : index
    %c0_47 = arith.constant 0 : index
    %80 = vector.load %arg16[%c0_46, %c0_47] : memref<128x128xf32, #tpu.memory_space<vmem>>, vector<128x128xf32>
    %cst_48 = arith.constant dense<0.000000e+00> : vector<2x128xf32>
    %81 = tpu.matmul %79, %80, %cst_48 {dimension_numbers = #tpu.dot_dimension_numbers<[1], [0], [0], [1], [0, 0, 1, 1], [], []>} : vector<2x128xf32>, vector<128x128xf32>, vector<2x128xf32> -> vector<2x128xf32>
    %c0_49 = arith.constant 0 : index
    %c0_50 = arith.constant 0 : index
    %82 = vector.load %arg17[%c0_49, %c0_50] : memref<1x128xf32, #tpu.memory_space<vmem>>, vector<1x128xf32>
    %83 = vector.broadcast %82 : vector<1x128xf32> to vector<2x128xf32>
    %84 = arith.addf %81, %83 : vector<2x128xf32>
    %cst_51 = arith.constant 0.000000e+00 : f32
    %85 = vector.broadcast %cst_51 : f32 to vector<2x128xf32>
    %86 = arith.maximumf %84, %85 : vector<2x128xf32>
    %c0_52 = arith.constant 0 : index
    %c0_53 = arith.constant 0 : index
    %87 = vector.load %arg18[%c0_52, %c0_53] : memref<128x128xf32, #tpu.memory_space<vmem>>, vector<128x128xf32>
    %cst_54 = arith.constant dense<0.000000e+00> : vector<2x128xf32>
    %88 = tpu.matmul %86, %87, %cst_54 {dimension_numbers = #tpu.dot_dimension_numbers<[1], [0], [0], [1], [0, 0, 1, 1], [], []>} : vector<2x128xf32>, vector<128x128xf32>, vector<2x128xf32> -> vector<2x128xf32>
    %c0_55 = arith.constant 0 : index
    %c0_56 = arith.constant 0 : index
    %89 = vector.load %arg19[%c0_55, %c0_56] : memref<1x128xf32, #tpu.memory_space<vmem>>, vector<1x128xf32>
    %90 = vector.broadcast %89 : vector<1x128xf32> to vector<2x128xf32>
    %91 = arith.addf %88, %90 : vector<2x128xf32>
    %92 = tpu.iota {dimensions = array<i32: 1>} : vector<1x128xi32>
    %c8_i32 = arith.constant 8 : i32
    %93 = vector.broadcast %c8_i32 : i32 to vector<1x128xi32>
    %94 = arith.cmpi slt, %92, %93 : vector<1x128xi32>
    %cst_57 = arith.constant -1.000000e+30 : f32
    %95 = vector.shape_cast %94 : vector<1x128xi1> to vector<1x128xi1>
    %96 = vector.broadcast %95 : vector<1x128xi1> to vector<2x128xi1>
    %97 = vector.broadcast %cst_57 : f32 to vector<2x128xf32>
    %98 = arith.select %96, %91, %97 : vector<2x128xi1>, vector<2x128xf32>
    %cst_58 = arith.constant dense<0xFF800000> : vector<2xf32>
    %99 = vector.multi_reduction <maximumf>, %98, %cst_58 [1] : vector<2x128xf32> to vector<2xf32>
    %100 = vector.shape_cast %99 : vector<2xf32> to vector<2x1xf32>
    %101 = vector.broadcast %100 : vector<2x1xf32> to vector<2x128xf32>
    %102 = arith.subf %98, %101 : vector<2x128xf32>
    %103 = math.exp %102 : vector<2x128xf32>
    %cst_59 = arith.constant 0.000000e+00 : f32
    %104 = vector.shape_cast %94 : vector<1x128xi1> to vector<1x128xi1>
    %105 = vector.broadcast %104 : vector<1x128xi1> to vector<2x128xi1>
    %106 = vector.broadcast %cst_59 : f32 to vector<2x128xf32>
    %107 = arith.select %105, %103, %106 : vector<2x128xi1>, vector<2x128xf32>
    %cst_60 = arith.constant dense<0.000000e+00> : vector<2xf32>
    %108 = vector.multi_reduction <add>, %107, %cst_60 [1] : vector<2x128xf32> to vector<2xf32>
    %109 = vector.shape_cast %108 : vector<2xf32> to vector<2x1xf32>
    %110 = vector.broadcast %109 : vector<2x1xf32> to vector<2x128xf32>
    %111 = arith.divf %107, %110 : vector<2x128xf32>
    %c0_61 = arith.constant 0 : index
    %c0_62 = arith.constant 0 : index
    %c0_63 = arith.constant 0 : index
    %112 = vector.load %arg20[%c0_61, %c0_62, %c0_63] : memref<1x2x128xf32, #tpu.memory_space<vmem>>, vector<1x2x128xf32>
    %113 = vector.shape_cast %112 : vector<1x2x128xf32> to vector<2x128xf32>
    %114 = vector.shape_cast %111 : vector<2x128xf32> to vector<1x2x128xf32>
    tpu.vector_store %arg20[%c0_61, %c0_62, %c0_63], %114 {strides = array<i32>} : memref<1x2x128xf32, #tpu.memory_space<vmem>>, vector<1x2x128xf32>,
    return
  }
  func.func @transform_0(%arg0: i32) -> (i32, i32, i32) {
    %c0_i32 = arith.constant 0 : i32
    %c0_i32_0 = arith.constant 0 : i32
    %c0_i32_1 = arith.constant 0 : i32
    return %arg0, %c0_i32, %c0_i32_0 : i32, i32, i32
  }
  func.func @transform_1(%arg0: i32) -> (i32, i32) {
    %c0_i32 = arith.constant 0 : i32
    %c0_i32_0 = arith.constant 0 : i32
    %c0_i32_1 = arith.constant 0 : i32
    return %c0_i32, %c0_i32_0 : i32, i32
  }
  func.func @transform_2(%arg0: i32) -> (i32, i32) {
    %c0_i32 = arith.constant 0 : i32
    %c0_i32_0 = arith.constant 0 : i32
    %c0_i32_1 = arith.constant 0 : i32
    return %c0_i32, %c0_i32_0 : i32, i32
  }
  func.func @transform_3(%arg0: i32) -> (i32, i32) {
    %c0_i32 = arith.constant 0 : i32
    %c0_i32_0 = arith.constant 0 : i32
    %c0_i32_1 = arith.constant 0 : i32
    return %c0_i32, %c0_i32_0 : i32, i32
  }
  func.func @transform_4(%arg0: i32) -> (i32, i32) {
    %c0_i32 = arith.constant 0 : i32
    %c0_i32_0 = arith.constant 0 : i32
    %c0_i32_1 = arith.constant 0 : i32
    return %c0_i32, %c0_i32_0 : i32, i32
  }
  func.func @transform_5(%arg0: i32) -> (i32, i32) {
    %c0_i32 = arith.constant 0 : i32
    %c0_i32_0 = arith.constant 0 : i32
    %c0_i32_1 = arith.constant 0 : i32
    return %c0_i32, %c0_i32_0 : i32, i32
  }
  func.func @transform_6(%arg0: i32) -> (i32, i32) {
    %c0_i32 = arith.constant 0 : i32
    %c0_i32_0 = arith.constant 0 : i32
    %c0_i32_1 = arith.constant 0 : i32
    return %c0_i32, %c0_i32_0 : i32, i32
  }
  func.func @transform_7(%arg0: i32) -> (i32, i32) {
    %c0_i32 = arith.constant 0 : i32
    %c0_i32_0 = arith.constant 0 : i32
    %c0_i32_1 = arith.constant 0 : i32
    return %c0_i32, %c0_i32_0 : i32, i32
  }
  func.func @transform_8(%arg0: i32) -> (i32, i32) {
    %c0_i32 = arith.constant 0 : i32
    %c0_i32_0 = arith.constant 0 : i32
    %c0_i32_1 = arith.constant 0 : i32
    return %c0_i32, %c0_i32_0 : i32, i32
  }
  func.func @transform_9(%arg0: i32) -> (i32, i32) {
    %c0_i32 = arith.constant 0 : i32
    %c0_i32_0 = arith.constant 0 : i32
    %c0_i32_1 = arith.constant 0 : i32
    return %c0_i32, %c0_i32_0 : i32, i32
  }
  func.func @transform_10(%arg0: i32) -> (i32, i32) {
    %c0_i32 = arith.constant 0 : i32
    %c0_i32_0 = arith.constant 0 : i32
    %c0_i32_1 = arith.constant 0 : i32
    return %c0_i32, %c0_i32_0 : i32, i32
  }
  func.func @transform_11(%arg0: i32) -> (i32, i32) {
    %c0_i32 = arith.constant 0 : i32
    %c0_i32_0 = arith.constant 0 : i32
    %c0_i32_1 = arith.constant 0 : i32
    return %c0_i32, %c0_i32_0 : i32, i32
  }
  func.func @transform_12(%arg0: i32) -> (i32, i32) {
    %c0_i32 = arith.constant 0 : i32
    %c0_i32_0 = arith.constant 0 : i32
    %c0_i32_1 = arith.constant 0 : i32
    return %c0_i32, %c0_i32_0 : i32, i32
  }
  func.func @transform_13(%arg0: i32) -> (i32, i32) {
    %c0_i32 = arith.constant 0 : i32
    %c0_i32_0 = arith.constant 0 : i32
    %c0_i32_1 = arith.constant 0 : i32
    return %c0_i32, %c0_i32_0 : i32, i32
  }
  func.func @transform_14(%arg0: i32) -> (i32, i32) {
    %c0_i32 = arith.constant 0 : i32
    %c0_i32_0 = arith.constant 0 : i32
    %c0_i32_1 = arith.constant 0 : i32
    return %c0_i32, %c0_i32_0 : i32, i32
  }
  func.func @transform_15(%arg0: i32) -> (i32, i32) {
    %c0_i32 = arith.constant 0 : i32
    %c0_i32_0 = arith.constant 0 : i32
    %c0_i32_1 = arith.constant 0 : i32
    return %c0_i32, %c0_i32_0 : i32, i32
  }
  func.func @transform_16(%arg0: i32) -> (i32, i32) {
    %c0_i32 = arith.constant 0 : i32
    %c0_i32_0 = arith.constant 0 : i32
    %c0_i32_1 = arith.constant 0 : i32
    return %c0_i32, %c0_i32_0 : i32, i32
  }
  func.func @transform_17(%arg0: i32) -> (i32, i32) {
    %c0_i32 = arith.constant 0 : i32
    %c0_i32_0 = arith.constant 0 : i32
    %c0_i32_1 = arith.constant 0 : i32
    return %c0_i32, %c0_i32_0 : i32, i32
  }
  func.func @transform_18(%arg0: i32) -> (i32, i32) {
    %c0_i32 = arith.constant 0 : i32
    %c0_i32_0 = arith.constant 0 : i32
    %c0_i32_1 = arith.constant 0 : i32
    return %c0_i32, %c0_i32_0 : i32, i32
  }
  func.func @transform_19(%arg0: i32) -> (i32, i32, i32) {
    %c0_i32 = arith.constant 0 : i32
    %c0_i32_0 = arith.constant 0 : i32
    %c0_i32_1 = arith.constant 0 : i32
    return %arg0, %c0_i32, %c0_i32_0 : i32, i32, i32
  }
}

</mosaic_0001>

<llo_original>
// kernel: mysimplenet_forward.1
$region0: #{mysimplenet_forward.1}
  #allocation0 [shape = 'u32[]', space=smem, size = 0x4, offset = 0x4, fixed_abs, tag = 'smem constant byte address 0x4 - core index']
  #allocation1 [shape = 'u32[144,128]{1,0:T(1,128)}', space=vmem, size = 0x12000, scoped, tag = 'internal scratch']
  %s0 = inlined_call_operand.vmem [shape: f32[1,1,128], index: 0, kind: input, shape index: {}]
  %s1 = inlined_call_operand.vmem [shape: f32[128,128], index: 1, kind: input, shape index: {}]
  %s2 = inlined_call_operand.vmem [shape: f32[1,128], index: 2, kind: input, shape index: {}]
  %s3 = inlined_call_operand.vmem [shape: f32[1,128], index: 3, kind: input, shape index: {}]
  %s4 = inlined_call_operand.vmem [shape: f32[128,640], index: 4, kind: input, shape index: {}]
  %s5 = inlined_call_operand.vmem [shape: f32[64,5], index: 5, kind: input, shape index: {}]
  %s6 = inlined_call_operand.vmem [shape: f32[64,1], index: 6, kind: input, shape index: {}]
  %s7 = inlined_call_operand.vmem [shape: f32[32,320], index: 7, kind: input, shape index: {}]
  %s8 = inlined_call_operand.vmem [shape: f32[32,1], index: 8, kind: input, shape index: {}]
  %s9 = inlined_call_operand.vmem [shape: f32[128,256], index: 9, kind: input, shape index: {}]
  %s10 = inlined_call_operand.vmem [shape: f32[32,256], index: 10, kind: input, shape index: {}]
  %s11 = inlined_call_operand.vmem [shape: f32[1,128], index: 11, kind: input, shape index: {}]
  %s12 = inlined_call_operand.vmem [shape: f32[1,128], index: 12, kind: input, shape index: {}]
  %s13 = inlined_call_operand.vmem [shape: f32[128,128], index: 13, kind: input, shape index: {}]
  %s14 = inlined_call_operand.vmem [shape: f32[1,128], index: 14, kind: input, shape index: {}]
  %s15 = inlined_call_operand.vmem [shape: f32[128,128], index: 15, kind: input, shape index: {}]
  %s16 = inlined_call_operand.vmem [shape: f32[1,128], index: 16, kind: input, shape index: {}]
  %s17 = inlined_call_operand.vmem [shape: f32[128,128], index: 17, kind: input, shape index: {}]
  %s18 = inlined_call_operand.vmem [shape: f32[1,128], index: 18, kind: input, shape index: {}]
  %s19 = inlined_call_operand.hbm [shape: f32[1,2,128], index: 19, kind: output, shape index: {}]
  %s20 = sld [smem:[#allocation0]]
  $region86: #{mysimplenet_forward.1} parent=0
    _
  %s22 = ssub.s32 1, %s20
  %s23 = scalar_select 0, %s22, %s20
  $region1: #{mysimplenet_forward.1} parent=0
    #allocation2 [shape = 'u8[1024]{0}', space=vmem, size = 0x400, scoped, tag = 'output window, operand 0, single buffered']
    #allocation3 [shape = 's32[1]{0}', space=sflag, size = 0x4, scoped, tag = 'scoped memory for mysimplenet_forward.1']
    %24 = vsyncpa [#allocation3], 0
    // Predicated region
    $region2: #{mysimplenet_forward.1} parent=1 // pred_check
      _
    $region3: #{mysimplenet_forward.1} parent=1 // pred_check_branch
      %26 = sbr.rel (0) target = $region5
    $region4: #{mysimplenet_forward.1} parent=1 // pred_region
      _
    $region5: #{mysimplenet_forward.1} parent=1 // pred_fallthru
      _
    // Predicated region
    $region6: #{mysimplenet_forward.1} parent=1 // pred_check
      _
    $region7: #{mysimplenet_forward.1} parent=1 // pred_check_branch
      %28 = sbr.rel (0) target = $region9
    $region8: #{mysimplenet_forward.1} parent=1 // pred_region
      _
    $region9: #{mysimplenet_forward.1} parent=1 // pred_fallthru
      _
    // Predicated region
    $region10: #{mysimplenet_forward.1} parent=1 // pred_check
      _
    $region11: #{mysimplenet_forward.1} parent=1 // pred_check_branch
      %30 = sbr.rel (0) target = $region13
    $region12: #{mysimplenet_forward.1} parent=1 // pred_region
      _
    $region13: #{mysimplenet_forward.1} parent=1 // pred_fallthru
      _
    // Predicated region
    $region14: #{mysimplenet_forward.1} parent=1 // pred_check
      _
    $region15: #{mysimplenet_forward.1} parent=1 // pred_check_branch
      %32 = sbr.rel (0) target = $region17
    $region16: #{mysimplenet_forward.1} parent=1 // pred_region
      _
    $region17: #{mysimplenet_forward.1} parent=1 // pred_fallthru
      _
    // Predicated region
    $region18: #{mysimplenet_forward.1} parent=1 // pred_check
      _
    $region19: #{mysimplenet_forward.1} parent=1 // pred_check_branch
      %34 = sbr.rel (0) target = $region21
    $region20: #{mysimplenet_forward.1} parent=1 // pred_region
      _
    $region21: #{mysimplenet_forward.1} parent=1 // pred_fallthru
      _
    // Predicated region
    $region22: #{mysimplenet_forward.1} parent=1 // pred_check
      _
    $region23: #{mysimplenet_forward.1} parent=1 // pred_check_branch
      %36 = sbr.rel (0) target = $region25
    $region24: #{mysimplenet_forward.1} parent=1 // pred_region
      _
    $region25: #{mysimplenet_forward.1} parent=1 // pred_fallthru
      _
    // Predicated region
    $region26: #{mysimplenet_forward.1} parent=1 // pred_check
      _
    $region27: #{mysimplenet_forward.1} parent=1 // pred_check_branch
      %38 = sbr.rel (0) target = $region29
    $region28: #{mysimplenet_forward.1} parent=1 // pred_region
      _
    $region29: #{mysimplenet_forward.1} parent=1 // pred_fallthru
      _
    // Predicated region
    $region30: #{mysimplenet_forward.1} parent=1 // pred_check
      _
    $region31: #{mysimplenet_forward.1} parent=1 // pred_check_branch
      %40 = sbr.rel (0) target = $region33
    $region32: #{mysimplenet_forward.1} parent=1 // pred_region
      _
    $region33: #{mysimplenet_forward.1} parent=1 // pred_fallthru
      _
    // Predicated region
    $region34: #{mysimplenet_forward.1} parent=1 // pred_check
      _
    $region35: #{mysimplenet_forward.1} parent=1 // pred_check_branch
      %42 = sbr.rel (0) target = $region37
    $region36: #{mysimplenet_forward.1} parent=1 // pred_region
      _
    $region37: #{mysimplenet_forward.1} parent=1 // pred_fallthru
      _
    // Predicated region
    $region38: #{mysimplenet_forward.1} parent=1 // pred_check
      _
    $region39: #{mysimplenet_forward.1} parent=1 // pred_check_branch
      %44 = sbr.rel (0) target = $region41
    $region40: #{mysimplenet_forward.1} parent=1 // pred_region
      _
    $region41: #{mysimplenet_forward.1} parent=1 // pred_fallthru
      _
    // Predicated region
    $region42: #{mysimplenet_forward.1} parent=1 // pred_check
      _
    $region43: #{mysimplenet_forward.1} parent=1 // pred_check_branch
      %46 = sbr.rel (0) target = $region45
    $region44: #{mysimplenet_forward.1} parent=1 // pred_region
      _
    $region45: #{mysimplenet_forward.1} parent=1 // pred_fallthru
      _
    // Predicated region
    $region46: #{mysimplenet_forward.1} parent=1 // pred_check
      _
    $region47: #{mysimplenet_forward.1} parent=1 // pred_check_branch
      %48 = sbr.rel (0) target = $region49
    $region48: #{mysimplenet_forward.1} parent=1 // pred_region
      _
    $region49: #{mysimplenet_forward.1} parent=1 // pred_fallthru
      _
    // Predicated region
    $region50: #{mysimplenet_forward.1} parent=1 // pred_check
      _
    $region51: #{mysimplenet_forward.1} parent=1 // pred_check_branch
      %50 = sbr.rel (0) target = $region53
    $region52: #{mysimplenet_forward.1} parent=1 // pred_region
      _
    $region53: #{mysimplenet_forward.1} parent=1 // pred_fallthru
      _
    // Predicated region
    $region54: #{mysimplenet_forward.1} parent=1 // pred_check
      _
    $region55: #{mysimplenet_forward.1} parent=1 // pred_check_branch
      %52 = sbr.rel (0) target = $region57
    $region56: #{mysimplenet_forward.1} parent=1 // pred_region
      _
    $region57: #{mysimplenet_forward.1} parent=1 // pred_fallthru
      _
    // Predicated region
    $region58: #{mysimplenet_forward.1} parent=1 // pred_check
      _
    $region59: #{mysimplenet_forward.1} parent=1 // pred_check_branch
      %54 = sbr.rel (0) target = $region61
    $region60: #{mysimplenet_forward.1} parent=1 // pred_region
      _
    $region61: #{mysimplenet_forward.1} parent=1 // pred_fallthru
      _
    // Predicated region
    $region62: #{mysimplenet_forward.1} parent=1 // pred_check
      _
    $region63: #{mysimplenet_forward.1} parent=1 // pred_check_branch
      %56 = sbr.rel (0) target = $region65
    $region64: #{mysimplenet_forward.1} parent=1 // pred_region
      _
    $region65: #{mysimplenet_forward.1} parent=1 // pred_fallthru
      _
    // Predicated region
    $region66: #{mysimplenet_forward.1} parent=1 // pred_check
      _
    $region67: #{mysimplenet_forward.1} parent=1 // pred_check_branch
      %58 = sbr.rel (0) target = $region69
    $region68: #{mysimplenet_forward.1} parent=1 // pred_region
      _
    $region69: #{mysimplenet_forward.1} parent=1 // pred_fallthru
      _
    // Predicated region
    $region70: #{mysimplenet_forward.1} parent=1 // pred_check
      _
    $region71: #{mysimplenet_forward.1} parent=1 // pred_check_branch
      %60 = sbr.rel (0) target = $region73
    $region72: #{mysimplenet_forward.1} parent=1 // pred_region
      _
    $region73: #{mysimplenet_forward.1} parent=1 // pred_fallthru
      _
    // Predicated region
    $region74: #{mysimplenet_forward.1} parent=1 // pred_check
      _
    $region75: #{mysimplenet_forward.1} parent=1 // pred_check_branch
      %62 = sbr.rel (0) target = $region77
    $region76: #{mysimplenet_forward.1} parent=1 // pred_region
      _
    $region77: #{mysimplenet_forward.1} parent=1 // pred_fallthru
      _
    %v63 = vld [vmem:[%s0] sm:$0x1]
    %v64 = vld [vmem:[%s1] sm:$0xff]
    %v65 = vld [vmem:[%s1 + $0x8] sm:$0xff]
    %v66 = vld [vmem:[%s1 + $0x10] sm:$0xff]
    %v67 = vld [vmem:[%s1 + $0x18] sm:$0xff]
    %v68 = vld [vmem:[%s1 + $0x20] sm:$0xff]
    %v69 = vld [vmem:[%s1 + $0x28] sm:$0xff]
    %v70 = vld [vmem:[%s1 + $0x30] sm:$0xff]
    %v71 = vld [vmem:[%s1 + $0x38] sm:$0xff]
    %v72 = vld [vmem:[%s1 + $0x40] sm:$0xff]
    %v73 = vld [vmem:[%s1 + $0x48] sm:$0xff]
    %v74 = vld [vmem:[%s1 + $0x50] sm:$0xff]
    %v75 = vld [vmem:[%s1 + $0x58] sm:$0xff]
    %v76 = vld [vmem:[%s1 + $0x60] sm:$0xff]
    %v77 = vld [vmem:[%s1 + $0x68] sm:$0xff]
    %v78 = vld [vmem:[%s1 + $0x70] sm:$0xff]
    %v79 = vld [vmem:[%s1 + $0x78] sm:$0xff]
    %80 = vmatprep.subr.mxu0 0.0
    %81 = vmatpush1.msra.mxu0 %v64
    %82 = vmatprep.subr.mxu0 0.0
    %83 = vmatpush1.msra.mxu0 %v65
    %84 = vmatprep.subr.mxu0 0.0
    %85 = vmatpush1.msra.mxu0 %v66
    %86 = vmatprep.subr.mxu0 0.0
    %87 = vmatpush1.msra.mxu0 %v67
    %88 = vmatprep.subr.mxu0 0.0
    %89 = vmatpush1.msra.mxu0 %v68
    %90 = vmatprep.subr.mxu0 0.0
    %91 = vmatpush1.msra.mxu0 %v69
    %92 = vmatprep.subr.mxu0 0.0
    %93 = vmatpush1.msra.mxu0 %v70
    %94 = vmatprep.subr.mxu0 0.0
    %95 = vmatpush1.msra.mxu0 %v71
    %96 = vmatprep.subr.mxu0 0.0
    %97 = vmatpush1.msra.mxu0 %v72
    %98 = vmatprep.subr.mxu0 0.0
    %99 = vmatpush1.msra.mxu0 %v73
    %100 = vmatprep.subr.mxu0 0.0
    %101 = vmatpush1.msra.mxu0 %v74
    %102 = vmatprep.subr.mxu0 0.0
    %103 = vmatpush1.msra.mxu0 %v75
    %104 = vmatprep.subr.mxu0 0.0
    %105 = vmatpush1.msra.mxu0 %v76
    %106 = vmatprep.subr.mxu0 0.0
    %107 = vmatpush1.msra.mxu0 %v77
    %108 = vmatprep.subr.mxu0 0.0
    %109 = vmatpush1.msra.mxu0 %v78
    %110 = vmatprep.subr.mxu0 0.0
    %111 = vmatpush1.msra.mxu0 %v79
    %112 = vmatprep.subr.mxu0 0.0
    %113 = vmatpush1.msra.mxu0 0.0
    %114 = vmatprep.subr.mxu0 0.0
    %115 = vmatpush1.msra.mxu0 0.0
    %116 = vmatprep.subr.mxu0 0.0
    %117 = vmatpush1.msra.mxu0 0.0
    %118 = vmatprep.subr.mxu0 0.0
    %119 = vmatpush1.msra.mxu0 0.0
    %120 = vmatprep.subr.mxu0 0.0
    %121 = vmatpush1.msra.mxu0 0.0
    %122 = vmatprep.subr.mxu0 0.0
    %123 = vmatpush1.msra.mxu0 0.0
    %124 = vmatprep.subr.mxu0 0.0
    %125 = vmatpush1.msra.mxu0 0.0
    %126 = vmatprep.subr.mxu0 0.0
    %127 = vmatpush1.msra.mxu0 0.0
    %128 = vmatprep.subr.mxu0 0.0
    %129 = vmatpush1.msra.mxu0 0.0
    %130 = vmatprep.subr.mxu0 0.0
    %131 = vmatpush1.msra.mxu0 0.0
    %132 = vmatprep.subr.mxu0 0.0
    %133 = vmatpush1.msra.mxu0 0.0
    %134 = vmatprep.subr.mxu0 0.0
    %135 = vmatpush1.msra.mxu0 0.0
    %136 = vmatprep.subr.mxu0 0.0
    %137 = vmatpush1.msra.mxu0 0.0
    %138 = vmatprep.subr.mxu0 0.0
    %139 = vmatpush1.msra.mxu0 0.0
    %140 = vmatprep.subr.mxu0 0.0
    %141 = vmatpush1.msra.mxu0 0.0
    %142 = vmatprep.subr.mxu0 0.0
    %143 = vmatpush1.msra.mxu0 0.0
    %144 = vmatprep.mubr.f32.mxu0 0.0
    %145 = vmatmul.mubr.f32.gmra.mrb[0].mxu0 %v63
    %v146 = vpop.f32.mrb[0].mxu0
    %v147 = vadd.f32 0.0, %v146
    %v148 = vpop.f32.mrb[0].mxu0
    %149 = vdwg.mxu0
    %v150 = vsub.f32 %v63, %v147
    %v151 = vmul.f32 %v150, %v150
    %152 = vmatprep.subr.mxu0 0.0
    %153 = vmatpush1.msra.mxu0 %v64
    %154 = vmatprep.subr.mxu0 0.0
    %155 = vmatpush1.msra.mxu0 %v65
    %156 = vmatprep.subr.mxu0 0.0
    %157 = vmatpush1.msra.mxu0 %v66
    %158 = vmatprep.subr.mxu0 0.0
    %159 = vmatpush1.msra.mxu0 %v67
    %160 = vmatprep.subr.mxu0 0.0
    %161 = vmatpush1.msra.mxu0 %v68
    %162 = vmatprep.subr.mxu0 0.0
    %163 = vmatpush1.msra.mxu0 %v69
    %164 = vmatprep.subr.mxu0 0.0
    %165 = vmatpush1.msra.mxu0 %v70
    %166 = vmatprep.subr.mxu0 0.0
    %167 = vmatpush1.msra.mxu0 %v71
    %168 = vmatprep.subr.mxu0 0.0
    %169 = vmatpush1.msra.mxu0 %v72
    %170 = vmatprep.subr.mxu0 0.0
    %171 = vmatpush1.msra.mxu0 %v73
    %172 = vmatprep.subr.mxu0 0.0
    %173 = vmatpush1.msra.mxu0 %v74
    %174 = vmatprep.subr.mxu0 0.0
    %175 = vmatpush1.msra.mxu0 %v75
    %176 = vmatprep.subr.mxu0 0.0
    %177 = vmatpush1.msra.mxu0 %v76
    %178 = vmatprep.subr.mxu0 0.0
    %179 = vmatpush1.msra.mxu0 %v77
    %180 = vmatprep.subr.mxu0 0.0
    %181 = vmatpush1.msra.mxu0 %v78
    %182 = vmatprep.subr.mxu0 0.0
    %183 = vmatpush1.msra.mxu0 %v79
    %184 = vmatprep.subr.mxu0 0.0
    %185 = vmatpush1.msra.mxu0 0.0
    %186 = vmatprep.subr.mxu0 0.0
    %187 = vmatpush1.msra.mxu0 0.0
    %188 = vmatprep.subr.mxu0 0.0
    %189 = vmatpush1.msra.mxu0 0.0
    %190 = vmatprep.subr.mxu0 0.0
    %191 = vmatpush1.msra.mxu0 0.0
    %192 = vmatprep.subr.mxu0 0.0
    %193 = vmatpush1.msra.mxu0 0.0
    %194 = vmatprep.subr.mxu0 0.0
    %195 = vmatpush1.msra.mxu0 0.0
    %196 = vmatprep.subr.mxu0 0.0
    %197 = vmatpush1.msra.mxu0 0.0
    %198 = vmatprep.subr.mxu0 0.0
    %199 = vmatpush1.msra.mxu0 0.0
    %200 = vmatprep.subr.mxu0 0.0
    %201 = vmatpush1.msra.mxu0 0.0
    %202 = vmatprep.subr.mxu0 0.0
    %203 = vmatpush1.msra.mxu0 0.0
    %204 = vmatprep.subr.mxu0 0.0
    %205 = vmatpush1.msra.mxu0 0.0
    %206 = vmatprep.subr.mxu0 0.0
    %207 = vmatpush1.msra.mxu0 0.0
    %208 = vmatprep.subr.mxu0 0.0
    %209 = vmatpush1.msra.mxu0 0.0
    %210 = vmatprep.subr.mxu0 0.0
    %211 = vmatpush1.msra.mxu0 0.0
    %212 = vmatprep.subr.mxu0 0.0
    %213 = vmatpush1.msra.mxu0 0.0
    %214 = vmatprep.subr.mxu0 0.0
    %215 = vmatpush1.msra.mxu0 0.0
    %216 = vmatprep.mubr.f32.mxu0 0.0
    %217 = vmatmul.mubr.f32.gmra.mrb[0].mxu0 %v151
    %v218 = vpop.f32.mrb[0].mxu0
    %v219 = vadd.f32 1e-05, %v218
    %v220 = vpop.f32.mrb[0].mxu0
    %221 = vdwg.mxu0
    %v222 = vrsqrt.pop %v219
    %v223 = vmul.f32 %v150, %v222
    %v224 = vld [vmem:[%s2] sm:$0x1]
    %v225 = vmul.f32 %v223, %v224
    %v226 = vld [vmem:[%s3] sm:$0x1]
    %v227 = vadd.f32 %v225, %v226
    %v228 = vld [vmem:[%s4] sm:$0xff]
    %v229 = vld [vmem:[%s4 + $0x8] sm:$0xff]
    %v230 = vld [vmem:[%s4 + $0x10] sm:$0xff]
    %v231 = vld [vmem:[%s4 + $0x18] sm:$0xff]
    %v232 = vld [vmem:[%s4 + $0x20] sm:$0xff]
    %v233 = vld [vmem:[%s4 + $0x28] sm:$0xff]
    %v234 = vld [vmem:[%s4 + $0x30] sm:$0xff]
    %v235 = vld [vmem:[%s4 + $0x38] sm:$0xff]
    %v236 = vld [vmem:[%s4 + $0x40] sm:$0xff]
    %v237 = vld [vmem:[%s4 + $0x48] sm:$0xff]
    %v238 = vld [vmem:[%s4 + $0x50] sm:$0xff]
    %v239 = vld [vmem:[%s4 + $0x58] sm:$0xff]
    %v240 = vld [vmem:[%s4 + $0x60] sm:$0xff]
    %v241 = vld [vmem:[%s4 + $0x68] sm:$0xff]
    %v242 = vld [vmem:[%s4 + $0x70] sm:$0xff]
    %v243 = vld [vmem:[%s4 + $0x78] sm:$0xff]
    %v244 = vld [vmem:[%s4 + $0x80] sm:$0xff]
    %v245 = vld [vmem:[%s4 + $0x88] sm:$0xff]
    %v246 = vld [vmem:[%s4 + $0x90] sm:$0xff]
    %v247 = vld [vmem:[%s4 + $0x98] sm:$0xff]
    %v248 = vld [vmem:[%s4 + $0xa0] sm:$0xff]
    %v249 = vld [vmem:[%s4 + $0xa8] sm:$0xff]
    %v250 = vld [vmem:[%s4 + $0xb0] sm:$0xff]
    %v251 = vld [vmem:[%s4 + $0xb8] sm:$0xff]
    %v252 = vld [vmem:[%s4 + $0xc0] sm:$0xff]
    %v253 = vld [vmem:[%s4 + $0xc8] sm:$0xff]
    %v254 = vld [vmem:[%s4 + $0xd0] sm:$0xff]
    %v255 = vld [vmem:[%s4 + $0xd8] sm:$0xff]
    %v256 = vld [vmem:[%s4 + $0xe0] sm:$0xff]
    %v257 = vld [vmem:[%s4 + $0xe8] sm:$0xff]
    %v258 = vld [vmem:[%s4 + $0xf0] sm:$0xff]
    %v259 = vld [vmem:[%s4 + $0xf8] sm:$0xff]
    %v260 = vld [vmem:[%s4 + $0x100] sm:$0xff]
    %v261 = vld [vmem:[%s4 + $0x108] sm:$0xff]
    %v262 = vld [vmem:[%s4 + $0x110] sm:$0xff]
    %v263 = vld [vmem:[%s4 + $0x118] sm:$0xff]
    %v264 = vld [vmem:[%s4 + $0x120] sm:$0xff]
    %v265 = vld [vmem:[%s4 + $0x128] sm:$0xff]
    %v266 = vld [vmem:[%s4 + $0x130] sm:$0xff]
    %v267 = vld [vmem:[%s4 + $0x138] sm:$0xff]
    %v268 = vld [vmem:[%s4 + $0x140] sm:$0xff]
    %v269 = vld [vmem:[%s4 + $0x148] sm:$0xff]
    %v270 = vld [vmem:[%s4 + $0x150] sm:$0xff]
    %v271 = vld [vmem:[%s4 + $0x158] sm:$0xff]
    %v272 = vld [vmem:[%s4 + $0x160] sm:$0xff]
    %v273 = vld [vmem:[%s4 + $0x168] sm:$0xff]
    %v274 = vld [vmem:[%s4 + $0x170] sm:$0xff]
    %v275 = vld [vmem:[%s4 + $0x178] sm:$0xff]
    %v276 = vld [vmem:[%s4 + $0x180] sm:$0xff]
    %v277 = vld [vmem:[%s4 + $0x188] sm:$0xff]
    %v278 = vld [vmem:[%s4 + $0x190] sm:$0xff]
    %v279 = vld [vmem:[%s4 + $0x198] sm:$0xff]
    %v280 = vld [vmem:[%s4 + $0x1a0] sm:$0xff]
    %v281 = vld [vmem:[%s4 + $0x1a8] sm:$0xff]
    %v282 = vld [vmem:[%s4 + $0x1b0] sm:$0xff]
    %v283 = vld [vmem:[%s4 + $0x1b8] sm:$0xff]
    %v284 = vld [vmem:[%s4 + $0x1c0] sm:$0xff]
    %v285 = vld [vmem:[%s4 + $0x1c8] sm:$0xff]
    %v286 = vld [vmem:[%s4 + $0x1d0] sm:$0xff]
    %v287 = vld [vmem:[%s4 + $0x1d8] sm:$0xff]
    %v288 = vld [vmem:[%s4 + $0x1e0] sm:$0xff]
    %v289 = vld [vmem:[%s4 + $0x1e8] sm:$0xff]
    %v290 = vld [vmem:[%s4 + $0x1f0] sm:$0xff]
    %v291 = vld [vmem:[%s4 + $0x1f8] sm:$0xff]
    %v292 = vld [vmem:[%s4 + $0x200] sm:$0xff]
    %v293 = vld [vmem:[%s4 + $0x208] sm:$0xff]
    %v294 = vld [vmem:[%s4 + $0x210] sm:$0xff]
    %v295 = vld [vmem:[%s4 + $0x218] sm:$0xff]
    %v296 = vld [vmem:[%s4 + $0x220] sm:$0xff]
    %v297 = vld [vmem:[%s4 + $0x228] sm:$0xff]
    %v298 = vld [vmem:[%s4 + $0x230] sm:$0xff]
    %v299 = vld [vmem:[%s4 + $0x238] sm:$0xff]
    %v300 = vld [vmem:[%s4 + $0x240] sm:$0xff]
    %v301 = vld [vmem:[%s4 + $0x248] sm:$0xff]
    %v302 = vld [vmem:[%s4 + $0x250] sm:$0xff]
    %v303 = vld [vmem:[%s4 + $0x258] sm:$0xff]
    %v304 = vld [vmem:[%s4 + $0x260] sm:$0xff]
    %v305 = vld [vmem:[%s4 + $0x268] sm:$0xff]
    %v306 = vld [vmem:[%s4 + $0x270] sm:$0xff]
    %v307 = vld [vmem:[%s4 + $0x278] sm:$0xff]
    %308 = vmatprep.subr.mxu0 %v229
    %309 = vmatpush1.msra.mxu0 %v228
    %310 = vmatprep.subr.mxu0 %v234
    %311 = vmatpush1.msra.mxu0 %v233
    %312 = vmatprep.subr.mxu0 %v239
    %313 = vmatpush1.msra.mxu0 %v238
    %314 = vmatprep.subr.mxu0 %v244
    %315 = vmatpush1.msra.mxu0 %v243
    %316 = vmatprep.subr.mxu0 %v249
    %317 = vmatpush1.msra.mxu0 %v248
    %318 = vmatprep.subr.mxu0 %v254
    %319 = vmatpush1.msra.mxu0 %v253
    %320 = vmatprep.subr.mxu0 %v259
    %321 = vmatpush1.msra.mxu0 %v258
    %322 = vmatprep.subr.mxu0 %v264
    %323 = vmatpush1.msra.mxu0 %v263
    %324 = vmatprep.subr.mxu0 %v269
    %325 = vmatpush1.msra.mxu0 %v268
    %326 = vmatprep.subr.mxu0 %v274
    %327 = vmatpush1.msra.mxu0 %v273
    %328 = vmatprep.subr.mxu0 %v279
    %329 = vmatpush1.msra.mxu0 %v278
    %330 = vmatprep.subr.mxu0 %v284
    %331 = vmatpush1.msra.mxu0 %v283
    %332 = vmatprep.subr.mxu0 %v289
    %333 = vmatpush1.msra.mxu0 %v288
    %334 = vmatprep.subr.mxu0 %v294
    %335 = vmatpush1.msra.mxu0 %v293
    %336 = vmatprep.subr.mxu0 %v299
    %337 = vmatpush1.msra.mxu0 %v298
    %338 = vmatprep.subr.mxu0 %v304
    %339 = vmatpush1.msra.mxu0 %v303
    %340 = vmatprep.subr.mxu0 0.0
    %341 = vmatpush1.msra.mxu0 0.0
    %342 = vmatprep.subr.mxu0 0.0
    %343 = vmatpush1.msra.mxu0 0.0
    %344 = vmatprep.subr.mxu0 0.0
    %345 = vmatpush1.msra.mxu0 0.0
    %346 = vmatprep.subr.mxu0 0.0
    %347 = vmatpush1.msra.mxu0 0.0
    %348 = vmatprep.subr.mxu0 0.0
    %349 = vmatpush1.msra.mxu0 0.0
    %350 = vmatprep.subr.mxu0 0.0
    %351 = vmatpush1.msra.mxu0 0.0
    %352 = vmatprep.subr.mxu0 0.0
    %353 = vmatpush1.msra.mxu0 0.0
    %354 = vmatprep.subr.mxu0 0.0
    %355 = vmatpush1.msra.mxu0 0.0
    %356 = vmatprep.subr.mxu0 0.0
    %357 = vmatpush1.msra.mxu0 0.0
    %358 = vmatprep.subr.mxu0 0.0
    %359 = vmatpush1.msra.mxu0 0.0
    %360 = vmatprep.subr.mxu0 0.0
    %361 = vmatpush1.msra.mxu0 0.0
    %362 = vmatprep.subr.mxu0 0.0
    %363 = vmatpush1.msra.mxu0 0.0
    %364 = vmatprep.subr.mxu0 0.0
    %365 = vmatpush1.msra.mxu0 0.0
    %366 = vmatprep.subr.mxu0 0.0
    %367 = vmatpush1.msra.mxu0 0.0
    %368 = vmatprep.subr.mxu0 0.0
    %369 = vmatpush1.msra.mxu0 0.0
    %370 = vmatprep.subr.mxu0 0.0
    %371 = vmatpush1.msra.mxu0 0.0
    %372 = vmatprep.mubr.f32.mxu0 0.0
    %373 = vmatmul.mubr.f32.gmra.mrb[0].mxu0 %v227
    %v374 = vpop.f32.mrb[0].mxu0
    %v375 = vadd.f32 0.0, %v374
    %v376 = vpop.f32.mrb[0].mxu0
    %v377 = vadd.f32 0.0, %v376
    %378 = vdwg.mxu0
    %379 = vmatprep.subr.mxu0 %v231
    %380 = vmatpush1.msra.mxu0 %v230
    %381 = vmatprep.subr.mxu0 %v236
    %382 = vmatpush1.msra.mxu0 %v235
    %383 = vmatprep.subr.mxu0 %v241
    %384 = vmatpush1.msra.mxu0 %v240
    %385 = vmatprep.subr.mxu0 %v246
    %386 = vmatpush1.msra.mxu0 %v245
    %387 = vmatprep.subr.mxu0 %v251
    %388 = vmatpush1.msra.mxu0 %v250
    %389 = vmatprep.subr.mxu0 %v256
    %390 = vmatpush1.msra.mxu0 %v255
    %391 = vmatprep.subr.mxu0 %v261
    %392 = vmatpush1.msra.mxu0 %v260
    %393 = vmatprep.subr.mxu0 %v266
    %394 = vmatpush1.msra.mxu0 %v265
    %395 = vmatprep.subr.mxu0 %v271
    %396 = vmatpush1.msra.mxu0 %v270
    %397 = vmatprep.subr.mxu0 %v276
    %398 = vmatpush1.msra.mxu0 %v275
    %399 = vmatprep.subr.mxu0 %v281
    %400 = vmatpush1.msra.mxu0 %v280
    %401 = vmatprep.subr.mxu0 %v286
    %402 = vmatpush1.msra.mxu0 %v285
    %403 = vmatprep.subr.mxu0 %v291
    %404 = vmatpush1.msra.mxu0 %v290
    %405 = vmatprep.subr.mxu0 %v296
    %406 = vmatpush1.msra.mxu0 %v295
    %407 = vmatprep.subr.mxu0 %v301
    %408 = vmatpush1.msra.mxu0 %v300
    %409 = vmatprep.subr.mxu0 %v306
    %410 = vmatpush1.msra.mxu0 %v305
    %411 = vmatprep.subr.mxu0 0.0
    %412 = vmatpush1.msra.mxu0 0.0
    %413 = vmatprep.subr.mxu0 0.0
    %414 = vmatpush1.msra.mxu0 0.0
    %415 = vmatprep.subr.mxu0 0.0
    %416 = vmatpush1.msra.mxu0 0.0
    %417 = vmatprep.subr.mxu0 0.0
    %418 = vmatpush1.msra.mxu0 0.0
    %419 = vmatprep.subr.mxu0 0.0
    %420 = vmatpush1.msra.mxu0 0.0
    %421 = vmatprep.subr.mxu0 0.0
    %422 = vmatpush1.msra.mxu0 0.0
    %423 = vmatprep.subr.mxu0 0.0
    %424 = vmatpush1.msra.mxu0 0.0
    %425 = vmatprep.subr.mxu0 0.0
    %426 = vmatpush1.msra.mxu0 0.0
    %427 = vmatprep.subr.mxu0 0.0
    %428 = vmatpush1.msra.mxu0 0.0
    %429 = vmatprep.subr.mxu0 0.0
    %430 = vmatpush1.msra.mxu0 0.0
    %431 = vmatprep.subr.mxu0 0.0
    %432 = vmatpush1.msra.mxu0 0.0
    %433 = vmatprep.subr.mxu0 0.0
    %434 = vmatpush1.msra.mxu0 0.0
    %435 = vmatprep.subr.mxu0 0.0
    %436 = vmatpush1.msra.mxu0 0.0
    %437 = vmatprep.subr.mxu0 0.0
    %438 = vmatpush1.msra.mxu0 0.0
    %439 = vmatprep.subr.mxu0 0.0
    %440 = vmatpush1.msra.mxu0 0.0
    %441 = vmatprep.subr.mxu0 0.0
    %442 = vmatpush1.msra.mxu0 0.0
    %443 = vmatprep.mubr.f32.mxu0 0.0
    %444 = vmatmul.mubr.f32.gmra.mrb[0].mxu0 %v227
    %v445 = vpop.f32.mrb[0].mxu0
    %v446 = vadd.f32 0.0, %v445
    %v447 = vpop.f32.mrb[0].mxu0
    %v448 = vadd.f32 0.0, %v447
    %449 = vdwg.mxu0
    %450 = vmatprep.subr.mxu0 0.0
    %451 = vmatpush1.msra.mxu0 %v232
    %452 = vmatprep.subr.mxu0 0.0
    %453 = vmatpush1.msra.mxu0 %v237
    %454 = vmatprep.subr.mxu0 0.0
    %455 = vmatpush1.msra.mxu0 %v242
    %456 = vmatprep.subr.mxu0 0.0
    %457 = vmatpush1.msra.mxu0 %v247
    %458 = vmatprep.subr.mxu0 0.0
    %459 = vmatpush1.msra.mxu0 %v252
    %460 = vmatprep.subr.mxu0 0.0
    %461 = vmatpush1.msra.mxu0 %v257
    %462 = vmatprep.subr.mxu0 0.0
    %463 = vmatpush1.msra.mxu0 %v262
    %464 = vmatprep.subr.mxu0 0.0
    %465 = vmatpush1.msra.mxu0 %v267
    %466 = vmatprep.subr.mxu0 0.0
    %467 = vmatpush1.msra.mxu0 %v272
    %468 = vmatprep.subr.mxu0 0.0
    %469 = vmatpush1.msra.mxu0 %v277
    %470 = vmatprep.subr.mxu0 0.0
    %471 = vmatpush1.msra.mxu0 %v282
    %472 = vmatprep.subr.mxu0 0.0
    %473 = vmatpush1.msra.mxu0 %v287
    %474 = vmatprep.subr.mxu0 0.0
    %475 = vmatpush1.msra.mxu0 %v292
    %476 = vmatprep.subr.mxu0 0.0
    %477 = vmatpush1.msra.mxu0 %v297
    %478 = vmatprep.subr.mxu0 0.0
    %479 = vmatpush1.msra.mxu0 %v302
    %480 = vmatprep.subr.mxu0 0.0
    %481 = vmatpush1.msra.mxu0 %v307
    %482 = vmatprep.subr.mxu0 0.0
    %483 = vmatpush1.msra.mxu0 0.0
    %484 = vmatprep.subr.mxu0 0.0
    %485 = vmatpush1.msra.mxu0 0.0
    %486 = vmatprep.subr.mxu0 0.0
    %487 = vmatpush1.msra.mxu0 0.0
    %488 = vmatprep.subr.mxu0 0.0
    %489 = vmatpush1.msra.mxu0 0.0
    %490 = vmatprep.subr.mxu0 0.0
    %491 = vmatpush1.msra.mxu0 0.0
    %492 = vmatprep.subr.mxu0 0.0
    %493 = vmatpush1.msra.mxu0 0.0
    %494 = vmatprep.subr.mxu0 0.0
    %495 = vmatpush1.msra.mxu0 0.0
    %496 = vmatprep.subr.mxu0 0.0
    %497 = vmatpush1.msra.mxu0 0.0
    %498 = vmatprep.subr.mxu0 0.0
    %499 = vmatpush1.msra.mxu0 0.0
    %500 = vmatprep.subr.mxu0 0.0
    %501 = vmatpush1.msra.mxu0 0.0
    %502 = vmatprep.subr.mxu0 0.0
    %503 = vmatpush1.msra.mxu0 0.0
    %504 = vmatprep.subr.mxu0 0.0
    %505 = vmatpush1.msra.mxu0 0.0
    %506 = vmatprep.subr.mxu0 0.0
    %507 = vmatpush1.msra.mxu0 0.0
    %508 = vmatprep.subr.mxu0 0.0
    %509 = vmatpush1.msra.mxu0 0.0
    %510 = vmatprep.subr.mxu0 0.0
    %511 = vmatpush1.msra.mxu0 0.0
    %512 = vmatprep.subr.mxu0 0.0
    %513 = vmatpush1.msra.mxu0 0.0
    %514 = vmatprep.mubr.f32.mxu0 0.0
    %515 = vmatmul.mubr.f32.gmra.mrb[0].mxu0 %v227
    %v516 = vpop.f32.mrb[0].mxu0
    %v517 = vadd.f32 0.0, %v516
    %v518 = vpop.f32.mrb[0].mxu0
    %519 = vdwg.mxu0
    %v521 = vrot.slane %v377, 7
    %v524 = vrot.slane %v446, 6
    %v527 = vrot.slane %v448, 5
    %v530 = vrot.slane %v517, 4
    %vm532 = vcmask 1040384
    %v533 = vsel %vm532, %v375, %v521
    %vm534 = vcmask 1041408
    %v535 = vsel %vm534, %v533, %v524
    %vm536 = vcmask 1042432
    %v537 = vsel %vm536, %v535, %v527
    %vm538 = vcmask 1043456
    %v539 = vsel %vm538, %v537, %v530
    %v540 = vld [vmem:[%s5] sm:$0xff]
    %v541 = vld [vmem:[%s5 + $0x8] sm:$0xff]
    %v542 = vld [vmem:[%s5 + $0x10] sm:$0xff]
    %v543 = vld [vmem:[%s5 + $0x18] sm:$0xff]
    %v544 = vld [vmem:[%s5 + $0x20] sm:$0xff]
    %v545 = vld [vmem:[%s5 + $0x28] sm:$0xff]
    %v546 = vld [vmem:[%s5 + $0x30] sm:$0xff]
    %v547 = vld [vmem:[%s5 + $0x38] sm:$0xff]
    %v548 = vld [vmem:[%s6] sm:$0xff]
    %v549 = vld [vmem:[%s6 + $0x8] sm:$0xff]
    %v550 = vld [vmem:[%s6 + $0x10] sm:$0xff]
    %v551 = vld [vmem:[%s6 + $0x18] sm:$0xff]
    %v552 = vld [vmem:[%s6 + $0x20] sm:$0xff]
    %v553 = vld [vmem:[%s6 + $0x28] sm:$0xff]
    %v554 = vld [vmem:[%s6 + $0x30] sm:$0xff]
    %v555 = vld [vmem:[%s6 + $0x38] sm:$0xff]
    %557 = vset.pattern.permute.xlu0 0
    %558 = vperm.xlu0 %557, %v548
    %v559 = vpop.permute.xlu0 %558
    %562 = vset.pattern.permute.xlu0 0
    %563 = vperm.xlu0 %562, %v549
    %v564 = vpop.permute.xlu0 %563
    %567 = vset.pattern.permute.xlu0 0
    %568 = vperm.xlu0 %567, %v550
    %v569 = vpop.permute.xlu0 %568
    %572 = vset.pattern.permute.xlu0 0
    %573 = vperm.xlu0 %572, %v551
    %v574 = vpop.permute.xlu0 %573
    %577 = vset.pattern.permute.xlu0 0
    %578 = vperm.xlu0 %577, %v552
    %v579 = vpop.permute.xlu0 %578
    %582 = vset.pattern.permute.xlu0 0
    %583 = vperm.xlu0 %582, %v553
    %v584 = vpop.permute.xlu0 %583
    %587 = vset.pattern.permute.xlu0 0
    %588 = vperm.xlu0 %587, %v554
    %v589 = vpop.permute.xlu0 %588
    %592 = vset.pattern.permute.xlu0 0
    %593 = vperm.xlu0 %592, %v555
    %v594 = vpop.permute.xlu0 %593
    %vm596 = vcmask 39936
    %v598 = vsel %vm596, %v540, 0
    %v601 = vsel %vm596, %v541, 0
    %v604 = vsel %vm596, %v542, 0
    %v607 = vsel %vm596, %v543, 0
    %v610 = vsel %vm596, %v544, 0
    %v613 = vsel %vm596, %v545, 0
    %v616 = vsel %vm596, %v546, 0
    %v619 = vsel %vm596, %v547, 0
    %vm621 = vcmask 1044480
    %v623 = vsel %vm621, %v539, 0
    %625 = vmatprep.subr.mxu0 0.0
    %626 = vmatpush1.msra.mxu0 %v623
    %627 = vmatprep.subr.mxu0 0.0
    %628 = vmatpush1.msra.mxu0 0.0
    %629 = vmatprep.subr.mxu0 0.0
    %630 = vmatpush1.msra.mxu0 0.0
    %631 = vmatprep.subr.mxu0 0.0
    %632 = vmatpush1.msra.mxu0 0.0
    %633 = vmatprep.subr.mxu0 0.0
    %634 = vmatpush1.msra.mxu0 0.0
    %635 = vmatprep.subr.mxu0 0.0
    %636 = vmatpush1.msra.mxu0 0.0
    %637 = vmatprep.subr.mxu0 0.0
    %638 = vmatpush1.msra.mxu0 0.0
    %639 = vmatprep.subr.mxu0 0.0
    %640 = vmatpush1.msra.mxu0 0.0
    %641 = vmatprep.subr.mxu0 0.0
    %642 = vmatpush1.msra.mxu0 0.0
    %643 = vmatprep.subr.mxu0 0.0
    %644 = vmatpush1.msra.mxu0 0.0
    %645 = vmatprep.subr.mxu0 0.0
    %646 = vmatpush1.msra.mxu0 0.0
    %647 = vmatprep.subr.mxu0 0.0
    %648 = vmatpush1.msra.mxu0 0.0
    %649 = vmatprep.subr.mxu0 0.0
    %650 = vmatpush1.msra.mxu0 0.0
    %651 = vmatprep.subr.mxu0 0.0
    %652 = vmatpush1.msra.mxu0 0.0
    %653 = vmatprep.subr.mxu0 0.0
    %654 = vmatpush1.msra.mxu0 0.0
    %655 = vmatprep.subr.mxu0 0.0
    %656 = vmatpush1.msra.mxu0 0.0
    %657 = vmatprep.subr.mxu0 0.0
    %658 = vmatpush1.msra.mxu0 0.0
    %659 = vmatprep.subr.mxu0 0.0
    %660 = vmatpush1.msra.mxu0 0.0
    %661 = vmatprep.subr.mxu0 0.0
    %662 = vmatpush1.msra.mxu0 0.0
    %663 = vmatprep.subr.mxu0 0.0
    %664 = vmatpush1.msra.mxu0 0.0
    %665 = vmatprep.subr.mxu0 0.0
    %666 = vmatpush1.msra.mxu0 0.0
    %667 = vmatprep.subr.mxu0 0.0
    %668 = vmatpush1.msra.mxu0 0.0
    %669 = vmatprep.subr.mxu0 0.0
    %670 = vmatpush1.msra.mxu0 0.0
    %671 = vmatprep.subr.mxu0 0.0
    %672 = vmatpush1.msra.mxu0 0.0
    %673 = vmatprep.subr.mxu0 0.0
    %674 = vmatpush1.msra.mxu0 0.0
    %675 = vmatprep.subr.mxu0 0.0
    %676 = vmatpush1.msra.mxu0 0.0
    %677 = vmatprep.subr.mxu0 0.0
    %678 = vmatpush1.msra.mxu0 0.0
    %679 = vmatprep.subr.mxu0 0.0
    %680 = vmatpush1.msra.mxu0 0.0
    %681 = vmatprep.subr.mxu0 0.0
    %682 = vmatpush1.msra.mxu0 0.0
    %683 = vmatprep.subr.mxu0 0.0
    %684 = vmatpush1.msra.mxu0 0.0
    %685 = vmatprep.subr.mxu0 0.0
    %686 = vmatpush1.msra.mxu0 0.0
    %687 = vmatprep.subr.mxu0 0.0
    %688 = vmatpush1.msra.mxu0 0.0
    %689 = vmatprep.mubr.f32.mxu0 0.0
    %690 = vmatmul.mubr.f32.gmra.mrb[0].mxu0 %v598
    %v691 = vpop.f32.mrb[0].mxu0
    %v692 = vadd.f32 %v559, %v691
    %v693 = vpop.f32.mrb[0].mxu0
    %694 = vmatprep.mubr.f32.mxu0 0.0
    %695 = vmatmul.mubr.f32.gmra.mrb[0].mxu0 %v601
    %v696 = vpop.f32.mrb[0].mxu0
    %v697 = vadd.f32 %v564, %v696
    %v698 = vpop.f32.mrb[0].mxu0
    %699 = vmatprep.mubr.f32.mxu0 0.0
    %700 = vmatmul.mubr.f32.gmra.mrb[0].mxu0 %v604
    %v701 = vpop.f32.mrb[0].mxu0
    %v702 = vadd.f32 %v569, %v701
    %v703 = vpop.f32.mrb[0].mxu0
    %704 = vmatprep.mubr.f32.mxu0 0.0
    %705 = vmatmul.mubr.f32.gmra.mrb[0].mxu0 %v607
    %v706 = vpop.f32.mrb[0].mxu0
    %v707 = vadd.f32 %v574, %v706
    %v708 = vpop.f32.mrb[0].mxu0
    %709 = vmatprep.mubr.f32.mxu0 0.0
    %710 = vmatmul.mubr.f32.gmra.mrb[0].mxu0 %v610
    %v711 = vpop.f32.mrb[0].mxu0
    %v712 = vadd.f32 %v579, %v711
    %v713 = vpop.f32.mrb[0].mxu0
    %714 = vmatprep.mubr.f32.mxu0 0.0
    %715 = vmatmul.mubr.f32.gmra.mrb[0].mxu0 %v613
    %v716 = vpop.f32.mrb[0].mxu0
    %v717 = vadd.f32 %v584, %v716
    %v718 = vpop.f32.mrb[0].mxu0
    %719 = vmatprep.mubr.f32.mxu0 0.0
    %720 = vmatmul.mubr.f32.gmra.mrb[0].mxu0 %v616
    %v721 = vpop.f32.mrb[0].mxu0
    %v722 = vadd.f32 %v589, %v721
    %v723 = vpop.f32.mrb[0].mxu0
    %724 = vmatprep.mubr.f32.mxu0 0.0
    %725 = vmatmul.mubr.f32.gmra.mrb[0].mxu0 %v619
    %v726 = vpop.f32.mrb[0].mxu0
    %v727 = vadd.f32 %v594, %v726
    %v728 = vpop.f32.mrb[0].mxu0
    %729 = vdwg.mxu0
    %v730 = vmax.f32 %v692, 0.0
    %v731 = vmax.f32 %v697, 0.0
    %v732 = vmax.f32 %v702, 0.0
    %v733 = vmax.f32 %v707, 0.0
    %v734 = vmax.f32 %v712, 0.0
    %v735 = vmax.f32 %v717, 0.0
    %v736 = vmax.f32 %v722, 0.0
    %v737 = vmax.f32 %v727, 0.0
    %738 = vmatprep.subr.mxu0 %v229
    %739 = vmatpush1.msra.mxu0 %v228
    %740 = vmatprep.subr.mxu0 %v234
    %741 = vmatpush1.msra.mxu0 %v233
    %742 = vmatprep.subr.mxu0 %v239
    %743 = vmatpush1.msra.mxu0 %v238
    %744 = vmatprep.subr.mxu0 %v244
    %745 = vmatpush1.msra.mxu0 %v243
    %746 = vmatprep.subr.mxu0 %v249
    %747 = vmatpush1.msra.mxu0 %v248
    %748 = vmatprep.subr.mxu0 %v254
    %749 = vmatpush1.msra.mxu0 %v253
    %750 = vmatprep.subr.mxu0 %v259
    %751 = vmatpush1.msra.mxu0 %v258
    %752 = vmatprep.subr.mxu0 %v264
    %753 = vmatpush1.msra.mxu0 %v263
    %754 = vmatprep.subr.mxu0 %v269
    %755 = vmatpush1.msra.mxu0 %v268
    %756 = vmatprep.subr.mxu0 %v274
    %757 = vmatpush1.msra.mxu0 %v273
    %758 = vmatprep.subr.mxu0 %v279
    %759 = vmatpush1.msra.mxu0 %v278
    %760 = vmatprep.subr.mxu0 %v284
    %761 = vmatpush1.msra.mxu0 %v283
    %762 = vmatprep.subr.mxu0 %v289
    %763 = vmatpush1.msra.mxu0 %v288
    %764 = vmatprep.subr.mxu0 %v294
    %765 = vmatpush1.msra.mxu0 %v293
    %766 = vmatprep.subr.mxu0 %v299
    %767 = vmatpush1.msra.mxu0 %v298
    %768 = vmatprep.subr.mxu0 %v304
    %769 = vmatpush1.msra.mxu0 %v303
    %770 = vmatprep.subr.mxu0 0.0
    %771 = vmatpush1.msra.mxu0 0.0
    %772 = vmatprep.subr.mxu0 0.0
    %773 = vmatpush1.msra.mxu0 0.0
    %774 = vmatprep.subr.mxu0 0.0
    %775 = vmatpush1.msra.mxu0 0.0
    %776 = vmatprep.subr.mxu0 0.0
    %777 = vmatpush1.msra.mxu0 0.0
    %778 = vmatprep.subr.mxu0 0.0
    %779 = vmatpush1.msra.mxu0 0.0
    %780 = vmatprep.subr.mxu0 0.0
    %781 = vmatpush1.msra.mxu0 0.0
    %782 = vmatprep.subr.mxu0 0.0
    %783 = vmatpush1.msra.mxu0 0.0
    %784 = vmatprep.subr.mxu0 0.0
    %785 = vmatpush1.msra.mxu0 0.0
    %786 = vmatprep.subr.mxu0 0.0
    %787 = vmatpush1.msra.mxu0 0.0
    %788 = vmatprep.subr.mxu0 0.0
    %789 = vmatpush1.msra.mxu0 0.0
    %790 = vmatprep.subr.mxu0 0.0
    %791 = vmatpush1.msra.mxu0 0.0
    %792 = vmatprep.subr.mxu0 0.0
    %793 = vmatpush1.msra.mxu0 0.0
    %794 = vmatprep.subr.mxu0 0.0
    %795 = vmatpush1.msra.mxu0 0.0
    %796 = vmatprep.subr.mxu0 0.0
    %797 = vmatpush1.msra.mxu0 0.0
    %798 = vmatprep.subr.mxu0 0.0
    %799 = vmatpush1.msra.mxu0 0.0
    %800 = vmatprep.subr.mxu0 0.0
    %801 = vmatpush1.msra.mxu0 0.0
    %802 = vmatprep.mubr.f32.mxu0 0.0
    %803 = vmatmul.mubr.f32.gmra.mrb[0].mxu0 %v730
    %v804 = vpop.f32.mrb[0].mxu0
    %v805 = vadd.f32 0.0, %v804
    %v806 = vpop.f32.mrb[0].mxu0
    %v807 = vadd.f32 0.0, %v806
    %808 = vmatprep.mubr.f32.mxu0 0.0
    %809 = vmatmul.mubr.f32.gmra.mrb[0].mxu0 %v731
    %v810 = vpop.f32.mrb[0].mxu0
    %v811 = vadd.f32 0.0, %v810
    %v812 = vpop.f32.mrb[0].mxu0
    %v813 = vadd.f32 0.0, %v812
    %814 = vmatprep.mubr.f32.mxu0 0.0
    %815 = vmatmul.mubr.f32.gmra.mrb[0].mxu0 %v732
    %v816 = vpop.f32.mrb[0].mxu0
    %v817 = vadd.f32 0.0, %v816
    %v818 = vpop.f32.mrb[0].mxu0
    %v819 = vadd.f32 0.0, %v818
    %820 = vmatprep.mubr.f32.mxu0 0.0
    %821 = vmatmul.mubr.f32.gmra.mrb[0].mxu0 %v733
    %v822 = vpop.f32.mrb[0].mxu0
    %v823 = vadd.f32 0.0, %v822
    %v824 = vpop.f32.mrb[0].mxu0
    %v825 = vadd.f32 0.0, %v824
    %826 = vmatprep.mubr.f32.mxu0 0.0
    %827 = vmatmul.mubr.f32.gmra.mrb[0].mxu0 %v734
    %v828 = vpop.f32.mrb[0].mxu0
    %v829 = vadd.f32 0.0, %v828
    %v830 = vpop.f32.mrb[0].mxu0
    %v831 = vadd.f32 0.0, %v830
    %832 = vmatprep.mubr.f32.mxu0 0.0
    %833 = vmatmul.mubr.f32.gmra.mrb[0].mxu0 %v735
    %v834 = vpop.f32.mrb[0].mxu0
    %v835 = vadd.f32 0.0, %v834
    %v836 = vpop.f32.mrb[0].mxu0
    %v837 = vadd.f32 0.0, %v836
    %838 = vmatprep.mubr.f32.mxu0 0.0
    %839 = vmatmul.mubr.f32.gmra.mrb[0].mxu0 %v736
    %v840 = vpop.f32.mrb[0].mxu0
    %v841 = vadd.f32 0.0, %v840
    %v842 = vpop.f32.mrb[0].mxu0
    %v843 = vadd.f32 0.0, %v842
    %844 = vmatprep.mubr.f32.mxu0 0.0
    %845 = vmatmul.mubr.f32.gmra.mrb[0].mxu0 %v737
    %v846 = vpop.f32.mrb[0].mxu0
    %v847 = vadd.f32 0.0, %v846
    %v848 = vpop.f32.mrb[0].mxu0
    %v849 = vadd.f32 0.0, %v848
    %850 = vdwg.mxu0
    %851 = vmatprep.subr.mxu0 %v231
    %852 = vmatpush1.msra.mxu0 %v230
    %853 = vmatprep.subr.mxu0 %v236
    %854 = vmatpush1.msra.mxu0 %v235
    %855 = vmatprep.subr.mxu0 %v241
    %856 = vmatpush1.msra.mxu0 %v240
    %857 = vmatprep.subr.mxu0 %v246
    %858 = vmatpush1.msra.mxu0 %v245
    %859 = vmatprep.subr.mxu0 %v251
    %860 = vmatpush1.msra.mxu0 %v250
    %861 = vmatprep.subr.mxu0 %v256
    %862 = vmatpush1.msra.mxu0 %v255
    %863 = vmatprep.subr.mxu0 %v261
    %864 = vmatpush1.msra.mxu0 %v260
    %865 = vmatprep.subr.mxu0 %v266
    %866 = vmatpush1.msra.mxu0 %v265
    %867 = vmatprep.subr.mxu0 %v271
    %868 = vmatpush1.msra.mxu0 %v270
    %869 = vmatprep.subr.mxu0 %v276
    %870 = vmatpush1.msra.mxu0 %v275
    %871 = vmatprep.subr.mxu0 %v281
    %872 = vmatpush1.msra.mxu0 %v280
    %873 = vmatprep.subr.mxu0 %v286
    %874 = vmatpush1.msra.mxu0 %v285
    %875 = vmatprep.subr.mxu0 %v291
    %876 = vmatpush1.msra.mxu0 %v290
    %877 = vmatprep.subr.mxu0 %v296
    %878 = vmatpush1.msra.mxu0 %v295
    %879 = vmatprep.subr.mxu0 %v301
    %880 = vmatpush1.msra.mxu0 %v300
    %881 = vmatprep.subr.mxu0 %v306
    %882 = vmatpush1.msra.mxu0 %v305
    %883 = vmatprep.subr.mxu0 0.0
    %884 = vmatpush1.msra.mxu0 0.0
    %885 = vmatprep.subr.mxu0 0.0
    %886 = vmatpush1.msra.mxu0 0.0
    %887 = vmatprep.subr.mxu0 0.0
    %888 = vmatpush1.msra.mxu0 0.0
    %889 = vmatprep.subr.mxu0 0.0
    %890 = vmatpush1.msra.mxu0 0.0
    %891 = vmatprep.subr.mxu0 0.0
    %892 = vmatpush1.msra.mxu0 0.0
    %893 = vmatprep.subr.mxu0 0.0
    %894 = vmatpush1.msra.mxu0 0.0
    %895 = vmatprep.subr.mxu0 0.0
    %896 = vmatpush1.msra.mxu0 0.0
    %897 = vmatprep.subr.mxu0 0.0
    %898 = vmatpush1.msra.mxu0 0.0
    %899 = vmatprep.subr.mxu0 0.0
    %900 = vmatpush1.msra.mxu0 0.0
    %901 = vmatprep.subr.mxu0 0.0
    %902 = vmatpush1.msra.mxu0 0.0
    %903 = vmatprep.subr.mxu0 0.0
    %904 = vmatpush1.msra.mxu0 0.0
    %905 = vmatprep.subr.mxu0 0.0
    %906 = vmatpush1.msra.mxu0 0.0
    %907 = vmatprep.subr.mxu0 0.0
    %908 = vmatpush1.msra.mxu0 0.0
    %909 = vmatprep.subr.mxu0 0.0
    %910 = vmatpush1.msra.mxu0 0.0
    %911 = vmatprep.subr.mxu0 0.0
    %912 = vmatpush1.msra.mxu0 0.0
    %913 = vmatprep.subr.mxu0 0.0
    %914 = vmatpush1.msra.mxu0 0.0
    %915 = vmatprep.mubr.f32.mxu0 0.0
    %916 = vmatmul.mubr.f32.gmra.mrb[0].mxu0 %v730
    %v917 = vpop.f32.mrb[0].mxu0
    %v918 = vadd.f32 0.0, %v917
    %v919 = vpop.f32.mrb[0].mxu0
    %v920 = vadd.f32 0.0, %v919
    %921 = vmatprep.mubr.f32.mxu0 0.0
    %922 = vmatmul.mubr.f32.gmra.mrb[0].mxu0 %v731
    %v923 = vpop.f32.mrb[0].mxu0
    %v924 = vadd.f32 0.0, %v923
    %v925 = vpop.f32.mrb[0].mxu0
    %v926 = vadd.f32 0.0, %v925
    %927 = vmatprep.mubr.f32.mxu0 0.0
    %928 = vmatmul.mubr.f32.gmra.mrb[0].mxu0 %v732
    %v929 = vpop.f32.mrb[0].mxu0
    %v930 = vadd.f32 0.0, %v929
    %v931 = vpop.f32.mrb[0].mxu0
    %v932 = vadd.f32 0.0, %v931
    %933 = vmatprep.mubr.f32.mxu0 0.0
    %934 = vmatmul.mubr.f32.gmra.mrb[0].mxu0 %v733
    %v935 = vpop.f32.mrb[0].mxu0
    %v936 = vadd.f32 0.0, %v935
    %v937 = vpop.f32.mrb[0].mxu0
    %v938 = vadd.f32 0.0, %v937
    %939 = vmatprep.mubr.f32.mxu0 0.0
    %940 = vmatmul.mubr.f32.gmra.mrb[0].mxu0 %v734
    %v941 = vpop.f32.mrb[0].mxu0
    %v942 = vadd.f32 0.0, %v941
    %v943 = vpop.f32.mrb[0].mxu0
    %v944 = vadd.f32 0.0, %v943
    %945 = vmatprep.mubr.f32.mxu0 0.0
    %946 = vmatmul.mubr.f32.gmra.mrb[0].mxu0 %v735
    %v947 = vpop.f32.mrb[0].mxu0
    %v948 = vadd.f32 0.0, %v947
    %v949 = vpop.f32.mrb[0].mxu0
    %v950 = vadd.f32 0.0, %v949
    %951 = vmatprep.mubr.f32.mxu0 0.0
    %952 = vmatmul.mubr.f32.gmra.mrb[0].mxu0 %v736
    %v953 = vpop.f32.mrb[0].mxu0
    %v954 = vadd.f32 0.0, %v953
    %v955 = vpop.f32.mrb[0].mxu0
    %v956 = vadd.f32 0.0, %v955
    %957 = vmatprep.mubr.f32.mxu0 0.0
    %958 = vmatmul.mubr.f32.gmra.mrb[0].mxu0 %v737
    %v959 = vpop.f32.mrb[0].mxu0
    %v960 = vadd.f32 0.0, %v959
    %v961 = vpop.f32.mrb[0].mxu0
    %v962 = vadd.f32 0.0, %v961
    %963 = vdwg.mxu0
    %964 = vmatprep.subr.mxu0 0.0
    %965 = vmatpush1.msra.mxu0 %v232
    %966 = vmatprep.subr.mxu0 0.0
    %967 = vmatpush1.msra.mxu0 %v237
    %968 = vmatprep.subr.mxu0 0.0
    %969 = vmatpush1.msra.mxu0 %v242
    %970 = vmatprep.subr.mxu0 0.0
    %971 = vmatpush1.msra.mxu0 %v247
    %972 = vmatprep.subr.mxu0 0.0
    %973 = vmatpush1.msra.mxu0 %v252
    %974 = vmatprep.subr.mxu0 0.0
    %975 = vmatpush1.msra.mxu0 %v257
    %976 = vmatprep.subr.mxu0 0.0
    %977 = vmatpush1.msra.mxu0 %v262
    %978 = vmatprep.subr.mxu0 0.0
    %979 = vmatpush1.msra.mxu0 %v267
    %980 = vmatprep.subr.mxu0 0.0
    %981 = vmatpush1.msra.mxu0 %v272
    %982 = vmatprep.subr.mxu0 0.0
    %983 = vmatpush1.msra.mxu0 %v277
    %984 = vmatprep.subr.mxu0 0.0
    %985 = vmatpush1.msra.mxu0 %v282
    %986 = vmatprep.subr.mxu0 0.0
    %987 = vmatpush1.msra.mxu0 %v287
    %988 = vmatprep.subr.mxu0 0.0
    %989 = vmatpush1.msra.mxu0 %v292
    %990 = vmatprep.subr.mxu0 0.0
    %991 = vmatpush1.msra.mxu0 %v297
    %992 = vmatprep.subr.mxu0 0.0
    %993 = vmatpush1.msra.mxu0 %v302
    %994 = vmatprep.subr.mxu0 0.0
    %995 = vmatpush1.msra.mxu0 %v307
    %996 = vmatprep.subr.mxu0 0.0
    %997 = vmatpush1.msra.mxu0 0.0
    %998 = vmatprep.subr.mxu0 0.0
    %999 = vmatpush1.msra.mxu0 0.0
    %1000 = vmatprep.subr.mxu0 0.0
    %1001 = vmatpush1.msra.mxu0 0.0
    %1002 = vmatprep.subr.mxu0 0.0
    %1003 = vmatpush1.msra.mxu0 0.0
    %1004 = vmatprep.subr.mxu0 0.0
    %1005 = vmatpush1.msra.mxu0 0.0
    %1006 = vmatprep.subr.mxu0 0.0
    %1007 = vmatpush1.msra.mxu0 0.0
    %1008 = vmatprep.subr.mxu0 0.0
    %1009 = vmatpush1.msra.mxu0 0.0
    %1010 = vmatprep.subr.mxu0 0.0
    %1011 = vmatpush1.msra.mxu0 0.0
    %1012 = vmatprep.subr.mxu0 0.0
    %1013 = vmatpush1.msra.mxu0 0.0
    %1014 = vmatprep.subr.mxu0 0.0
    %1015 = vmatpush1.msra.mxu0 0.0
    %1016 = vmatprep.subr.mxu0 0.0
    %1017 = vmatpush1.msra.mxu0 0.0
    %1018 = vmatprep.subr.mxu0 0.0
    %1019 = vmatpush1.msra.mxu0 0.0
    %1020 = vmatprep.subr.mxu0 0.0
    %1021 = vmatpush1.msra.mxu0 0.0
    %1022 = vmatprep.subr.mxu0 0.0
    %1023 = vmatpush1.msra.mxu0 0.0
    %1024 = vmatprep.subr.mxu0 0.0
    %1025 = vmatpush1.msra.mxu0 0.0
    %1026 = vmatprep.subr.mxu0 0.0
    %1027 = vmatpush1.msra.mxu0 0.0
    %1028 = vmatprep.mubr.f32.mxu0 0.0
    %1029 = vmatmul.mubr.f32.gmra.mrb[0].mxu0 %v730
    %v1030 = vpop.f32.mrb[0].mxu0
    %v1031 = vadd.f32 0.0, %v1030
    %v1032 = vpop.f32.mrb[0].mxu0
    %1033 = vmatprep.mubr.f32.mxu0 0.0
    %1034 = vmatmul.mubr.f32.gmra.mrb[0].mxu0 %v731
    %v1035 = vpop.f32.mrb[0].mxu0
    %v1036 = vadd.f32 0.0, %v1035
    %v1037 = vpop.f32.mrb[0].mxu0
    %1038 = vmatprep.mubr.f32.mxu0 0.0
    %1039 = vmatmul.mubr.f32.gmra.mrb[0].mxu0 %v732
    %v1040 = vpop.f32.mrb[0].mxu0
    %v1041 = vadd.f32 0.0, %v1040
    %v1042 = vpop.f32.mrb[0].mxu0
    %1043 = vmatprep.mubr.f32.mxu0 0.0
    %1044 = vmatmul.mubr.f32.gmra.mrb[0].mxu0 %v733
    %v1045 = vpop.f32.mrb[0].mxu0
    %v1046 = vadd.f32 0.0, %v1045
    %v1047 = vpop.f32.mrb[0].mxu0
    %1048 = vmatprep.mubr.f32.mxu0 0.0
    %1049 = vmatmul.mubr.f32.gmra.mrb[0].mxu0 %v734
    %v1050 = vpop.f32.mrb[0].mxu0
    %v1051 = vadd.f32 0.0, %v1050
    %v1052 = vpop.f32.mrb[0].mxu0
    %1053 = vmatprep.mubr.f32.mxu0 0.0
    %1054 = vmatmul.mubr.f32.gmra.mrb[0].mxu0 %v735
    %v1055 = vpop.f32.mrb[0].mxu0
    %v1056 = vadd.f32 0.0, %v1055
    %v1057 = vpop.f32.mrb[0].mxu0
    %1058 = vmatprep.mubr.f32.mxu0 0.0
    %1059 = vmatmul.mubr.f32.gmra.mrb[0].mxu0 %v736
    %v1060 = vpop.f32.mrb[0].mxu0
    %v1061 = vadd.f32 0.0, %v1060
    %v1062 = vpop.f32.mrb[0].mxu0
    %1063 = vmatprep.mubr.f32.mxu0 0.0
    %1064 = vmatmul.mubr.f32.gmra.mrb[0].mxu0 %v737
    %v1065 = vpop.f32.mrb[0].mxu0
    %v1066 = vadd.f32 0.0, %v1065
    %v1067 = vpop.f32.mrb[0].mxu0
    %1068 = vdwg.mxu0
    %v1069 = vld [vmem:[%s7] sm:$0xff]
    %v1070 = vld [vmem:[%s7 + $0x8] sm:$0xff]
    %v1071 = vld [vmem:[%s7 + $0x10] sm:$0xff]
    %v1072 = vld [vmem:[%s7 + $0x18] sm:$0xff]
    %v1073 = vld [vmem:[%s7 + $0x20] sm:$0xff]
    %v1074 = vld [vmem:[%s7 + $0x28] sm:$0xff]
    %v1075 = vld [vmem:[%s7 + $0x30] sm:$0xff]
    %v1076 = vld [vmem:[%s7 + $0x38] sm:$0xff]
    %v1077 = vld [vmem:[%s7 + $0x40] sm:$0xff]
    %v1078 = vld [vmem:[%s7 + $0x48] sm:$0xff]
    %v1079 = vld [vmem:[%s7 + $0x50] sm:$0xff]
    %v1080 = vld [vmem:[%s7 + $0x58] sm:$0xff]
    %v1081 = vld [vmem:[%s8] sm:$0xff]
    %v1082 = vld [vmem:[%s8 + $0x8] sm:$0xff]
    %v1083 = vld [vmem:[%s8 + $0x10] sm:$0xff]
    %v1084 = vld [vmem:[%s8 + $0x18] sm:$0xff]
    %1086 = vset.pattern.permute.xlu0 0
    %1087 = vperm.xlu0 %1086, %v1081
    %v1088 = vpop.permute.xlu0 %1087
    %1091 = vset.pattern.permute.xlu0 0
    %1092 = vperm.xlu0 %1091, %v1082
    %v1093 = vpop.permute.xlu0 %1092
    %1096 = vset.pattern.permute.xlu0 0
    %1097 = vperm.xlu0 %1096, %v1083
    %v1098 = vpop.permute.xlu0 %1097
    %1101 = vset.pattern.permute.xlu0 0
    %1102 = vperm.xlu0 %1101, %v1084
    %v1103 = vpop.permute.xlu0 %1102
    %vm1105 = vcmask 523264
    %v1107 = vsel %vm1105, %v1071, 0
    %v1110 = vsel %vm1105, %v1074, 0
    %v1113 = vsel %vm1105, %v1077, 0
    %v1116 = vsel %vm1105, %v1080, 0
    %1118 = vmatprep.subr.mxu0 0.0
    %1119 = vmatpush1.msra.mxu0 %v805
    %1120 = vmatprep.subr.mxu0 0.0
    %1121 = vmatpush1.msra.mxu0 %v811
    %1122 = vmatprep.subr.mxu0 0.0
    %1123 = vmatpush1.msra.mxu0 %v817
    %1124 = vmatprep.subr.mxu0 0.0
    %1125 = vmatpush1.msra.mxu0 %v823
    %1126 = vmatprep.subr.mxu0 0.0
    %1127 = vmatpush1.msra.mxu0 %v829
    %1128 = vmatprep.subr.mxu0 0.0
    %1129 = vmatpush1.msra.mxu0 %v835
    %1130 = vmatprep.subr.mxu0 0.0
    %1131 = vmatpush1.msra.mxu0 %v841
    %1132 = vmatprep.subr.mxu0 0.0
    %1133 = vmatpush1.msra.mxu0 %v847
    %1134 = vmatprep.subr.mxu0 0.0
    %1135 = vmatpush1.msra.mxu0 %v807
    %1136 = vmatprep.subr.mxu0 0.0
    %1137 = vmatpush1.msra.mxu0 %v813
    %1138 = vmatprep.subr.mxu0 0.0
    %1139 = vmatpush1.msra.mxu0 %v819
    %1140 = vmatprep.subr.mxu0 0.0
    %1141 = vmatpush1.msra.mxu0 %v825
    %1142 = vmatprep.subr.mxu0 0.0
    %1143 = vmatpush1.msra.mxu0 %v831
    %1144 = vmatprep.subr.mxu0 0.0
    %1145 = vmatpush1.msra.mxu0 %v837
    %1146 = vmatprep.subr.mxu0 0.0
    %1147 = vmatpush1.msra.mxu0 %v843
    %1148 = vmatprep.subr.mxu0 0.0
    %1149 = vmatpush1.msra.mxu0 %v849
    %1150 = vmatprep.subr.mxu0 0.0
    %1151 = vmatpush1.msra.mxu0 %v918
    %1152 = vmatprep.subr.mxu0 0.0
    %1153 = vmatpush1.msra.mxu0 %v924
    %1154 = vmatprep.subr.mxu0 0.0
    %1155 = vmatpush1.msra.mxu0 %v930
    %1156 = vmatprep.subr.mxu0 0.0
    %1157 = vmatpush1.msra.mxu0 %v936
    %1158 = vmatprep.subr.mxu0 0.0
    %1159 = vmatpush1.msra.mxu0 %v942
    %1160 = vmatprep.subr.mxu0 0.0
    %1161 = vmatpush1.msra.mxu0 %v948
    %1162 = vmatprep.subr.mxu0 0.0
    %1163 = vmatpush1.msra.mxu0 %v954
    %1164 = vmatprep.subr.mxu0 0.0
    %1165 = vmatpush1.msra.mxu0 %v960
    %1166 = vmatprep.subr.mxu0 0.0
    %1167 = vmatpush1.msra.mxu0 %v920
    %1168 = vmatprep.subr.mxu0 0.0
    %1169 = vmatpush1.msra.mxu0 %v926
    %1170 = vmatprep.subr.mxu0 0.0
    %1171 = vmatpush1.msra.mxu0 %v932
    %1172 = vmatprep.subr.mxu0 0.0
    %1173 = vmatpush1.msra.mxu0 %v938
    %1174 = vmatprep.subr.mxu0 0.0
    %1175 = vmatpush1.msra.mxu0 %v944
    %1176 = vmatprep.subr.mxu0 0.0
    %1177 = vmatpush1.msra.mxu0 %v950
    %1178 = vmatprep.subr.mxu0 0.0
    %1179 = vmatpush1.msra.mxu0 %v956
    %1180 = vmatprep.subr.mxu0 0.0
    %1181 = vmatpush1.msra.mxu0 %v962
    %1182 = vmatprep.mubr.f32.mxu0 %v1070
    %1183 = vmatmul.mubr.f32.gmra.mrb[0].mxu0 %v1069
    %v1184 = vpop.f32.mrb[0].mxu0
    %v1185 = vadd.f32 %v1088, %v1184
    %v1186 = vpop.f32.mrb[0].mxu0
    %1187 = vmatprep.mubr.f32.mxu0 %v1073
    %1188 = vmatmul.mubr.f32.gmra.mrb[0].mxu0 %v1072
    %v1189 = vpop.f32.mrb[0].mxu0
    %v1190 = vadd.f32 %v1093, %v1189
    %v1191 = vpop.f32.mrb[0].mxu0
    %1192 = vmatprep.mubr.f32.mxu0 %v1076
    %1193 = vmatmul.mubr.f32.gmra.mrb[0].mxu0 %v1075
    %v1194 = vpop.f32.mrb[0].mxu0
    %v1195 = vadd.f32 %v1098, %v1194
    %v1196 = vpop.f32.mrb[0].mxu0
    %1197 = vmatprep.mubr.f32.mxu0 %v1079
    %1198 = vmatmul.mubr.f32.gmra.mrb[0].mxu0 %v1078
    %v1199 = vpop.f32.mrb[0].mxu0
    %v1200 = vadd.f32 %v1103, %v1199
    %v1201 = vpop.f32.mrb[0].mxu0
    %1202 = vdwg.mxu0
    %1203 = vmatprep.subr.mxu0 0.0
    %1204 = vmatpush1.msra.mxu0 %v1031
    %1205 = vmatprep.subr.mxu0 0.0
    %1206 = vmatpush1.msra.mxu0 %v1036
    %1207 = vmatprep.subr.mxu0 0.0
    %1208 = vmatpush1.msra.mxu0 %v1041
    %1209 = vmatprep.subr.mxu0 0.0
    %1210 = vmatpush1.msra.mxu0 %v1046
    %1211 = vmatprep.subr.mxu0 0.0
    %1212 = vmatpush1.msra.mxu0 %v1051
    %1213 = vmatprep.subr.mxu0 0.0
    %1214 = vmatpush1.msra.mxu0 %v1056
    %1215 = vmatprep.subr.mxu0 0.0
    %1216 = vmatpush1.msra.mxu0 %v1061
    %1217 = vmatprep.subr.mxu0 0.0
    %1218 = vmatpush1.msra.mxu0 %v1066
    %1219 = vmatprep.subr.mxu0 0.0
    %1220 = vmatpush1.msra.mxu0 0.0
    %1221 = vmatprep.subr.mxu0 0.0
    %1222 = vmatpush1.msra.mxu0 0.0
    %1223 = vmatprep.subr.mxu0 0.0
    %1224 = vmatpush1.msra.mxu0 0.0
    %1225 = vmatprep.subr.mxu0 0.0
    %1226 = vmatpush1.msra.mxu0 0.0
    %1227 = vmatprep.subr.mxu0 0.0
    %1228 = vmatpush1.msra.mxu0 0.0
    %1229 = vmatprep.subr.mxu0 0.0
    %1230 = vmatpush1.msra.mxu0 0.0
    %1231 = vmatprep.subr.mxu0 0.0
    %1232 = vmatpush1.msra.mxu0 0.0
    %1233 = vmatprep.subr.mxu0 0.0
    %1234 = vmatpush1.msra.mxu0 0.0
    %1235 = vmatprep.subr.mxu0 0.0
    %1236 = vmatpush1.msra.mxu0 0.0
    %1237 = vmatprep.subr.mxu0 0.0
    %1238 = vmatpush1.msra.mxu0 0.0
    %1239 = vmatprep.subr.mxu0 0.0
    %1240 = vmatpush1.msra.mxu0 0.0
    %1241 = vmatprep.subr.mxu0 0.0
    %1242 = vmatpush1.msra.mxu0 0.0
    %1243 = vmatprep.subr.mxu0 0.0
    %1244 = vmatpush1.msra.mxu0 0.0
    %1245 = vmatprep.subr.mxu0 0.0
    %1246 = vmatpush1.msra.mxu0 0.0
    %1247 = vmatprep.subr.mxu0 0.0
    %1248 = vmatpush1.msra.mxu0 0.0
    %1249 = vmatprep.subr.mxu0 0.0
    %1250 = vmatpush1.msra.mxu0 0.0
    %1251 = vmatprep.subr.mxu0 0.0
    %1252 = vmatpush1.msra.mxu0 0.0
    %1253 = vmatprep.subr.mxu0 0.0
    %1254 = vmatpush1.msra.mxu0 0.0
    %1255 = vmatprep.subr.mxu0 0.0
    %1256 = vmatpush1.msra.mxu0 0.0
    %1257 = vmatprep.subr.mxu0 0.0
    %1258 = vmatpush1.msra.mxu0 0.0
    %1259 = vmatprep.subr.mxu0 0.0
    %1260 = vmatpush1.msra.mxu0 0.0
    %1261 = vmatprep.subr.mxu0 0.0
    %1262 = vmatpush1.msra.mxu0 0.0
    %1263 = vmatprep.subr.mxu0 0.0
    %1264 = vmatpush1.msra.mxu0 0.0
    %1265 = vmatprep.subr.mxu0 0.0
    %1266 = vmatpush1.msra.mxu0 0.0
    %1267 = vmatprep.mubr.f32.mxu0 0.0
    %1268 = vmatmul.mubr.f32.gmra.mrb[0].mxu0 %v1107
    %v1269 = vpop.f32.mrb[0].mxu0
    %v1270 = vadd.f32 %v1185, %v1269
    %v1271 = vpop.f32.mrb[0].mxu0
    %1272 = vmatprep.mubr.f32.mxu0 0.0
    %1273 = vmatmul.mubr.f32.gmra.mrb[0].mxu0 %v1110
    %v1274 = vpop.f32.mrb[0].mxu0
    %v1275 = vadd.f32 %v1190, %v1274
    %v1276 = vpop.f32.mrb[0].mxu0
    %1277 = vmatprep.mubr.f32.mxu0 0.0
    %1278 = vmatmul.mubr.f32.gmra.mrb[0].mxu0 %v1113
    %v1279 = vpop.f32.mrb[0].mxu0
    %v1280 = vadd.f32 %v1195, %v1279
    %v1281 = vpop.f32.mrb[0].mxu0
    %1282 = vmatprep.mubr.f32.mxu0 0.0
    %1283 = vmatmul.mubr.f32.gmra.mrb[0].mxu0 %v1116
    %v1284 = vpop.f32.mrb[0].mxu0
    %v1285 = vadd.f32 %v1200, %v1284
    %v1286 = vpop.f32.mrb[0].mxu0
    %1287 = vdwg.mxu0
    %v1288 = vld [vmem:[%s9] sm:$0xff]
    %v1289 = vld [vmem:[%s9 + $0x8] sm:$0xff]
    %v1290 = vld [vmem:[%s9 + $0x10] sm:$0xff]
    %v1291 = vld [vmem:[%s9 + $0x18] sm:$0xff]
    %v1292 = vld [vmem:[%s9 + $0x20] sm:$0xff]
    %v1293 = vld [vmem:[%s9 + $0x28] sm:$0xff]
    %v1294 = vld [vmem:[%s9 + $0x30] sm:$0xff]
    %v1295 = vld [vmem:[%s9 + $0x38] sm:$0xff]
    %v1296 = vld [vmem:[%s9 + $0x40] sm:$0xff]
    %v1297 = vld [vmem:[%s9 + $0x48] sm:$0xff]
    %v1298 = vld [vmem:[%s9 + $0x50] sm:$0xff]
    %v1299 = vld [vmem:[%s9 + $0x58] sm:$0xff]
    %v1300 = vld [vmem:[%s9 + $0x60] sm:$0xff]
    %v1301 = vld [vmem:[%s9 + $0x68] sm:$0xff]
    %v1302 = vld [vmem:[%s9 + $0x70] sm:$0xff]
    %v1303 = vld [vmem:[%s9 + $0x78] sm:$0xff]
    %v1304 = vld [vmem:[%s9 + $0x80] sm:$0xff]
    %v1305 = vld [vmem:[%s9 + $0x88] sm:$0xff]
    %v1306 = vld [vmem:[%s9 + $0x90] sm:$0xff]
    %v1307 = vld [vmem:[%s9 + $0x98] sm:$0xff]
    %v1308 = vld [vmem:[%s9 + $0xa0] sm:$0xff]
    %v1309 = vld [vmem:[%s9 + $0xa8] sm:$0xff]
    %v1310 = vld [vmem:[%s9 + $0xb0] sm:$0xff]
    %v1311 = vld [vmem:[%s9 + $0xb8] sm:$0xff]
    %v1312 = vld [vmem:[%s9 + $0xc0] sm:$0xff]
    %v1313 = vld [vmem:[%s9 + $0xc8] sm:$0xff]
    %v1314 = vld [vmem:[%s9 + $0xd0] sm:$0xff]
    %v1315 = vld [vmem:[%s9 + $0xd8] sm:$0xff]
    %v1316 = vld [vmem:[%s9 + $0xe0] sm:$0xff]
    %v1317 = vld [vmem:[%s9 + $0xe8] sm:$0xff]
    %v1318 = vld [vmem:[%s9 + $0xf0] sm:$0xff]
    %v1319 = vld [vmem:[%s9 + $0xf8] sm:$0xff]
    %1320 = vmatprep.subr.mxu0 %v1289
    %1321 = vmatpush1.msra.mxu0 %v1288
    %1322 = vmatprep.subr.mxu0 %v1291
    %1323 = vmatpush1.msra.mxu0 %v1290
    %1324 = vmatprep.subr.mxu0 %v1293
    %1325 = vmatpush1.msra.mxu0 %v1292
    %1326 = vmatprep.subr.mxu0 %v1295
    %1327 = vmatpush1.msra.mxu0 %v1294
    %1328 = vmatprep.subr.mxu0 %v1297
    %1329 = vmatpush1.msra.mxu0 %v1296
    %1330 = vmatprep.subr.mxu0 %v1299
    %1331 = vmatpush1.msra.mxu0 %v1298
    %1332 = vmatprep.subr.mxu0 %v1301
    %1333 = vmatpush1.msra.mxu0 %v1300
    %1334 = vmatprep.subr.mxu0 %v1303
    %1335 = vmatpush1.msra.mxu0 %v1302
    %1336 = vmatprep.subr.mxu0 %v1305
    %1337 = vmatpush1.msra.mxu0 %v1304
    %1338 = vmatprep.subr.mxu0 %v1307
    %1339 = vmatpush1.msra.mxu0 %v1306
    %1340 = vmatprep.subr.mxu0 %v1309
    %1341 = vmatpush1.msra.mxu0 %v1308
    %1342 = vmatprep.subr.mxu0 %v1311
    %1343 = vmatpush1.msra.mxu0 %v1310
    %1344 = vmatprep.subr.mxu0 %v1313
    %1345 = vmatpush1.msra.mxu0 %v1312
    %1346 = vmatprep.subr.mxu0 %v1315
    %1347 = vmatpush1.msra.mxu0 %v1314
    %1348 = vmatprep.subr.mxu0 %v1317
    %1349 = vmatpush1.msra.mxu0 %v1316
    %1350 = vmatprep.subr.mxu0 %v1319
    %1351 = vmatpush1.msra.mxu0 %v1318
    %1352 = vmatprep.subr.mxu0 0.0
    %1353 = vmatpush1.msra.mxu0 0.0
    %1354 = vmatprep.subr.mxu0 0.0
    %1355 = vmatpush1.msra.mxu0 0.0
    %1356 = vmatprep.subr.mxu0 0.0
    %1357 = vmatpush1.msra.mxu0 0.0
    %1358 = vmatprep.subr.mxu0 0.0
    %1359 = vmatpush1.msra.mxu0 0.0
    %1360 = vmatprep.subr.mxu0 0.0
    %1361 = vmatpush1.msra.mxu0 0.0
    %1362 = vmatprep.subr.mxu0 0.0
    %1363 = vmatpush1.msra.mxu0 0.0
    %1364 = vmatprep.subr.mxu0 0.0
    %1365 = vmatpush1.msra.mxu0 0.0
    %1366 = vmatprep.subr.mxu0 0.0
    %1367 = vmatpush1.msra.mxu0 0.0
    %1368 = vmatprep.subr.mxu0 0.0
    %1369 = vmatpush1.msra.mxu0 0.0
    %1370 = vmatprep.subr.mxu0 0.0
    %1371 = vmatpush1.msra.mxu0 0.0
    %1372 = vmatprep.subr.mxu0 0.0
    %1373 = vmatpush1.msra.mxu0 0.0
    %1374 = vmatprep.subr.mxu0 0.0
    %1375 = vmatpush1.msra.mxu0 0.0
    %1376 = vmatprep.subr.mxu0 0.0
    %1377 = vmatpush1.msra.mxu0 0.0
    %1378 = vmatprep.subr.mxu0 0.0
    %1379 = vmatpush1.msra.mxu0 0.0
    %1380 = vmatprep.subr.mxu0 0.0
    %1381 = vmatpush1.msra.mxu0 0.0
    %1382 = vmatprep.subr.mxu0 0.0
    %1383 = vmatpush1.msra.mxu0 0.0
    %1384 = vmatprep.mubr.f32.mxu0 0.0
    %1385 = vmatmul.mubr.f32.gmra.mrb[0].mxu0 %v1270
    %v1386 = vpop.f32.mrb[0].mxu0
    %v1387 = vadd.f32 0.0, %v1386
    %v1388 = vpop.f32.mrb[0].mxu0
    %v1389 = vadd.f32 0.0, %v1388
    %1390 = vmatprep.mubr.f32.mxu0 0.0
    %1391 = vmatmul.mubr.f32.gmra.mrb[0].mxu0 %v1275
    %v1392 = vpop.f32.mrb[0].mxu0
    %v1393 = vadd.f32 0.0, %v1392
    %v1394 = vpop.f32.mrb[0].mxu0
    %v1395 = vadd.f32 0.0, %v1394
    %1396 = vmatprep.mubr.f32.mxu0 0.0
    %1397 = vmatmul.mubr.f32.gmra.mrb[0].mxu0 %v1280
    %v1398 = vpop.f32.mrb[0].mxu0
    %v1399 = vadd.f32 0.0, %v1398
    %v1400 = vpop.f32.mrb[0].mxu0
    %v1401 = vadd.f32 0.0, %v1400
    %1402 = vmatprep.mubr.f32.mxu0 0.0
    %1403 = vmatmul.mubr.f32.gmra.mrb[0].mxu0 %v1285
    %v1404 = vpop.f32.mrb[0].mxu0
    %v1405 = vadd.f32 0.0, %v1404
    %v1406 = vpop.f32.mrb[0].mxu0
    %v1407 = vadd.f32 0.0, %v1406
    %1408 = vdwg.mxu0
    %v1409 = vld [vmem:[%s10] sm:$0xff]
    %v1410 = vld [vmem:[%s10 + $0x8] sm:$0xff]
    %v1411 = vld [vmem:[%s10 + $0x10] sm:$0xff]
    %v1412 = vld [vmem:[%s10 + $0x18] sm:$0xff]
    %v1413 = vld [vmem:[%s10 + $0x20] sm:$0xff]
    %v1414 = vld [vmem:[%s10 + $0x28] sm:$0xff]
    %v1415 = vld [vmem:[%s10 + $0x30] sm:$0xff]
    %v1416 = vld [vmem:[%s10 + $0x38] sm:$0xff]
    %v1417 = vmul.f32 %v1409, %v1387
    %v1418 = vmul.f32 %v1410, %v1389
    %v1419 = vmul.f32 %v1411, %v1393
    %v1420 = vmul.f32 %v1412, %v1395
    %v1421 = vmul.f32 %v1413, %v1399
    %v1422 = vmul.f32 %v1414, %v1401
    %v1423 = vmul.f32 %v1415, %v1405
    %v1424 = vmul.f32 %v1416, %v1407
    %v1425 = vadd.f32 %v1417, %v1419
    %v1426 = vadd.f32 %v1425, %v1421
    %v1427 = vadd.f32 %v1426, %v1423
    %v1428 = vrot.slane %v1427, 4
    %v1429 = vadd.f32 %v1427, %v1428
    %v1430 = vrot.slane %v1429, 2
    %v1431 = vadd.f32 %v1429, %v1430
    %v1432 = vrot.slane %v1431, 1
    %v1433 = vadd.f32 %v1431, %v1432
    %v1434 = vadd.f32 %v1418, %v1420
    %v1435 = vadd.f32 %v1434, %v1422
    %v1436 = vadd.f32 %v1435, %v1424
    %v1437 = vrot.slane %v1436, 4
    %v1438 = vadd.f32 %v1436, %v1437
    %v1439 = vrot.slane %v1438, 2
    %v1440 = vadd.f32 %v1438, %v1439
    %v1441 = vrot.slane %v1440, 1
    %v1442 = vadd.f32 %v1440, %v1441
    %v1443 = vsel %vm532, %v1433, %v1442
    %v1444 = vsel %vm534, %v1443, 0.0
    %1445 = vadd.xlane.f32.xlu0 %v1444
    %v1446 = vpop.xlane.xlu0 %1445
    %v1447 = vrcp.pop 128.0
    %v1448 = vmul.f32 %v1446, %v1447
    %v1449 = vsub.f32 %v1443, %v1448
    %v1450 = vmul.f32 %v1449, %v1449
    %v1451 = vsel %vm534, %v1450, 0.0
    %1452 = vadd.xlane.f32.xlu0 %v1451
    %v1453 = vpop.xlane.xlu0 %1452
    %v1454 = vmul.f32 %v1453, %v1447
    %v1455 = vadd.f32 %v1454, 1e-05
    %v1456 = vrsqrt.pop %v1455
    %v1457 = vmul.f32 %v1449, %v1456
    %v1458 = vld [vmem:[%s11] sm:$0x1]
    %v1460 = vlaneseq
    %v1461 = vshrl.u32 %v1460, 7
    %v1462 = vsub.s32 0, %v1461
    %v1463 = vrot.slane %v1458, %v1462
    %v1465 = vmul.f32 %v1457, %v1463
    %v1466 = vld [vmem:[%s12] sm:$0x1]
    %v1468 = vlaneseq
    %v1469 = vshrl.u32 %v1468, 7
    %v1470 = vsub.s32 0, %v1469
    %v1471 = vrot.slane %v1466, %v1470
    %v1473 = vadd.f32 %v1465, %v1471
    %v1474 = vld [vmem:[%s13] sm:$0xff]
    %v1475 = vld [vmem:[%s13 + $0x8] sm:$0xff]
    %v1476 = vld [vmem:[%s13 + $0x10] sm:$0xff]
    %v1477 = vld [vmem:[%s13 + $0x18] sm:$0xff]
    %v1478 = vld [vmem:[%s13 + $0x20] sm:$0xff]
    %v1479 = vld [vmem:[%s13 + $0x28] sm:$0xff]
    %v1480 = vld [vmem:[%s13 + $0x30] sm:$0xff]
    %v1481 = vld [vmem:[%s13 + $0x38] sm:$0xff]
    %v1482 = vld [vmem:[%s13 + $0x40] sm:$0xff]
    %v1483 = vld [vmem:[%s13 + $0x48] sm:$0xff]
    %v1484 = vld [vmem:[%s13 + $0x50] sm:$0xff]
    %v1485 = vld [vmem:[%s13 + $0x58] sm:$0xff]
    %v1486 = vld [vmem:[%s13 + $0x60] sm:$0xff]
    %v1487 = vld [vmem:[%s13 + $0x68] sm:$0xff]
    %v1488 = vld [vmem:[%s13 + $0x70] sm:$0xff]
    %v1489 = vld [vmem:[%s13 + $0x78] sm:$0xff]
    %v1490 = vld [vmem:[%s14] sm:$0x1]
    %v1492 = vlaneseq
    %v1493 = vshrl.u32 %v1492, 7
    %v1494 = vsub.s32 0, %v1493
    %v1495 = vrot.slane %v1490, %v1494
    %1497 = vmatprep.subr.mxu0 0.0
    %1498 = vmatpush1.msra.mxu0 %v1474
    %1499 = vmatprep.subr.mxu0 0.0
    %1500 = vmatpush1.msra.mxu0 %v1475
    %1501 = vmatprep.subr.mxu0 0.0
    %1502 = vmatpush1.msra.mxu0 %v1476
    %1503 = vmatprep.subr.mxu0 0.0
    %1504 = vmatpush1.msra.mxu0 %v1477
    %1505 = vmatprep.subr.mxu0 0.0
    %1506 = vmatpush1.msra.mxu0 %v1478
    %1507 = vmatprep.subr.mxu0 0.0
    %1508 = vmatpush1.msra.mxu0 %v1479
    %1509 = vmatprep.subr.mxu0 0.0
    %1510 = vmatpush1.msra.mxu0 %v1480
    %1511 = vmatprep.subr.mxu0 0.0
    %1512 = vmatpush1.msra.mxu0 %v1481
    %1513 = vmatprep.subr.mxu0 0.0
    %1514 = vmatpush1.msra.mxu0 %v1482
    %1515 = vmatprep.subr.mxu0 0.0
    %1516 = vmatpush1.msra.mxu0 %v1483
    %1517 = vmatprep.subr.mxu0 0.0
    %1518 = vmatpush1.msra.mxu0 %v1484
    %1519 = vmatprep.subr.mxu0 0.0
    %1520 = vmatpush1.msra.mxu0 %v1485
    %1521 = vmatprep.subr.mxu0 0.0
    %1522 = vmatpush1.msra.mxu0 %v1486
    %1523 = vmatprep.subr.mxu0 0.0
    %1524 = vmatpush1.msra.mxu0 %v1487
    %1525 = vmatprep.subr.mxu0 0.0
    %1526 = vmatpush1.msra.mxu0 %v1488
    %1527 = vmatprep.subr.mxu0 0.0
    %1528 = vmatpush1.msra.mxu0 %v1489
    %1529 = vmatprep.subr.mxu0 0.0
    %1530 = vmatpush1.msra.mxu0 0.0
    %1531 = vmatprep.subr.mxu0 0.0
    %1532 = vmatpush1.msra.mxu0 0.0
    %1533 = vmatprep.subr.mxu0 0.0
    %1534 = vmatpush1.msra.mxu0 0.0
    %1535 = vmatprep.subr.mxu0 0.0
    %1536 = vmatpush1.msra.mxu0 0.0
    %1537 = vmatprep.subr.mxu0 0.0
    %1538 = vmatpush1.msra.mxu0 0.0
    %1539 = vmatprep.subr.mxu0 0.0
    %1540 = vmatpush1.msra.mxu0 0.0
    %1541 = vmatprep.subr.mxu0 0.0
    %1542 = vmatpush1.msra.mxu0 0.0
    %1543 = vmatprep.subr.mxu0 0.0
    %1544 = vmatpush1.msra.mxu0 0.0
    %1545 = vmatprep.subr.mxu0 0.0
    %1546 = vmatpush1.msra.mxu0 0.0
    %1547 = vmatprep.subr.mxu0 0.0
    %1548 = vmatpush1.msra.mxu0 0.0
    %1549 = vmatprep.subr.mxu0 0.0
    %1550 = vmatpush1.msra.mxu0 0.0
    %1551 = vmatprep.subr.mxu0 0.0
    %1552 = vmatpush1.msra.mxu0 0.0
    %1553 = vmatprep.subr.mxu0 0.0
    %1554 = vmatpush1.msra.mxu0 0.0
    %1555 = vmatprep.subr.mxu0 0.0
    %1556 = vmatpush1.msra.mxu0 0.0
    %1557 = vmatprep.subr.mxu0 0.0
    %1558 = vmatpush1.msra.mxu0 0.0
    %1559 = vmatprep.subr.mxu0 0.0
    %1560 = vmatpush1.msra.mxu0 0.0
    %1561 = vmatprep.mubr.f32.mxu0 0.0
    %1562 = vmatmul.mubr.f32.gmra.mrb[0].mxu0 %v1473
    %v1563 = vpop.f32.mrb[0].mxu0
    %v1564 = vadd.f32 %v1495, %v1563
    %v1565 = vpop.f32.mrb[0].mxu0
    %1566 = vdwg.mxu0
    %v1567 = vmax.f32 %v1564, 0.0
    %v1568 = vld [vmem:[%s15] sm:$0xff]
    %v1569 = vld [vmem:[%s15 + $0x8] sm:$0xff]
    %v1570 = vld [vmem:[%s15 + $0x10] sm:$0xff]
    %v1571 = vld [vmem:[%s15 + $0x18] sm:$0xff]
    %v1572 = vld [vmem:[%s15 + $0x20] sm:$0xff]
    %v1573 = vld [vmem:[%s15 + $0x28] sm:$0xff]
    %v1574 = vld [vmem:[%s15 + $0x30] sm:$0xff]
    %v1575 = vld [vmem:[%s15 + $0x38] sm:$0xff]
    %v1576 = vld [vmem:[%s15 + $0x40] sm:$0xff]
    %v1577 = vld [vmem:[%s15 + $0x48] sm:$0xff]
    %v1578 = vld [vmem:[%s15 + $0x50] sm:$0xff]
    %v1579 = vld [vmem:[%s15 + $0x58] sm:$0xff]
    %v1580 = vld [vmem:[%s15 + $0x60] sm:$0xff]
    %v1581 = vld [vmem:[%s15 + $0x68] sm:$0xff]
    %v1582 = vld [vmem:[%s15 + $0x70] sm:$0xff]
    %v1583 = vld [vmem:[%s15 + $0x78] sm:$0xff]
    %v1584 = vld [vmem:[%s16] sm:$0x1]
    %v1586 = vlaneseq
    %v1587 = vshrl.u32 %v1586, 7
    %v1588 = vsub.s32 0, %v1587
    %v1589 = vrot.slane %v1584, %v1588
    %1591 = vmatprep.subr.mxu0 0.0
    %1592 = vmatpush1.msra.mxu0 %v1568
    %1593 = vmatprep.subr.mxu0 0.0
    %1594 = vmatpush1.msra.mxu0 %v1569
    %1595 = vmatprep.subr.mxu0 0.0
    %1596 = vmatpush1.msra.mxu0 %v1570
    %1597 = vmatprep.subr.mxu0 0.0
    %1598 = vmatpush1.msra.mxu0 %v1571
    %1599 = vmatprep.subr.mxu0 0.0
    %1600 = vmatpush1.msra.mxu0 %v1572
    %1601 = vmatprep.subr.mxu0 0.0
    %1602 = vmatpush1.msra.mxu0 %v1573
    %1603 = vmatprep.subr.mxu0 0.0
    %1604 = vmatpush1.msra.mxu0 %v1574
    %1605 = vmatprep.subr.mxu0 0.0
    %1606 = vmatpush1.msra.mxu0 %v1575
    %1607 = vmatprep.subr.mxu0 0.0
    %1608 = vmatpush1.msra.mxu0 %v1576
    %1609 = vmatprep.subr.mxu0 0.0
    %1610 = vmatpush1.msra.mxu0 %v1577
    %1611 = vmatprep.subr.mxu0 0.0
    %1612 = vmatpush1.msra.mxu0 %v1578
    %1613 = vmatprep.subr.mxu0 0.0
    %1614 = vmatpush1.msra.mxu0 %v1579
    %1615 = vmatprep.subr.mxu0 0.0
    %1616 = vmatpush1.msra.mxu0 %v1580
    %1617 = vmatprep.subr.mxu0 0.0
    %1618 = vmatpush1.msra.mxu0 %v1581
    %1619 = vmatprep.subr.mxu0 0.0
    %1620 = vmatpush1.msra.mxu0 %v1582
    %1621 = vmatprep.subr.mxu0 0.0
    %1622 = vmatpush1.msra.mxu0 %v1583
    %1623 = vmatprep.subr.mxu0 0.0
    %1624 = vmatpush1.msra.mxu0 0.0
    %1625 = vmatprep.subr.mxu0 0.0
    %1626 = vmatpush1.msra.mxu0 0.0
    %1627 = vmatprep.subr.mxu0 0.0
    %1628 = vmatpush1.msra.mxu0 0.0
    %1629 = vmatprep.subr.mxu0 0.0
    %1630 = vmatpush1.msra.mxu0 0.0
    %1631 = vmatprep.subr.mxu0 0.0
    %1632 = vmatpush1.msra.mxu0 0.0
    %1633 = vmatprep.subr.mxu0 0.0
    %1634 = vmatpush1.msra.mxu0 0.0
    %1635 = vmatprep.subr.mxu0 0.0
    %1636 = vmatpush1.msra.mxu0 0.0
    %1637 = vmatprep.subr.mxu0 0.0
    %1638 = vmatpush1.msra.mxu0 0.0
    %1639 = vmatprep.subr.mxu0 0.0
    %1640 = vmatpush1.msra.mxu0 0.0
    %1641 = vmatprep.subr.mxu0 0.0
    %1642 = vmatpush1.msra.mxu0 0.0
    %1643 = vmatprep.subr.mxu0 0.0
    %1644 = vmatpush1.msra.mxu0 0.0
    %1645 = vmatprep.subr.mxu0 0.0
    %1646 = vmatpush1.msra.mxu0 0.0
    %1647 = vmatprep.subr.mxu0 0.0
    %1648 = vmatpush1.msra.mxu0 0.0
    %1649 = vmatprep.subr.mxu0 0.0
    %1650 = vmatpush1.msra.mxu0 0.0
    %1651 = vmatprep.subr.mxu0 0.0
    %1652 = vmatpush1.msra.mxu0 0.0
    %1653 = vmatprep.subr.mxu0 0.0
    %1654 = vmatpush1.msra.mxu0 0.0
    %1655 = vmatprep.mubr.f32.mxu0 0.0
    %1656 = vmatmul.mubr.f32.gmra.mrb[0].mxu0 %v1567
    %v1657 = vpop.f32.mrb[0].mxu0
    %v1658 = vadd.f32 %v1589, %v1657
    %v1659 = vpop.f32.mrb[0].mxu0
    %1660 = vdwg.mxu0
    %v1661 = vmax.f32 %v1658, 0.0
    %v1662 = vld [vmem:[%s17] sm:$0xff]
    %v1663 = vld [vmem:[%s17 + $0x8] sm:$0xff]
    %v1664 = vld [vmem:[%s17 + $0x10] sm:$0xff]
    %v1665 = vld [vmem:[%s17 + $0x18] sm:$0xff]
    %v1666 = vld [vmem:[%s17 + $0x20] sm:$0xff]
    %v1667 = vld [vmem:[%s17 + $0x28] sm:$0xff]
    %v1668 = vld [vmem:[%s17 + $0x30] sm:$0xff]
    %v1669 = vld [vmem:[%s17 + $0x38] sm:$0xff]
    %v1670 = vld [vmem:[%s17 + $0x40] sm:$0xff]
    %v1671 = vld [vmem:[%s17 + $0x48] sm:$0xff]
    %v1672 = vld [vmem:[%s17 + $0x50] sm:$0xff]
    %v1673 = vld [vmem:[%s17 + $0x58] sm:$0xff]
    %v1674 = vld [vmem:[%s17 + $0x60] sm:$0xff]
    %v1675 = vld [vmem:[%s17 + $0x68] sm:$0xff]
    %v1676 = vld [vmem:[%s17 + $0x70] sm:$0xff]
    %v1677 = vld [vmem:[%s17 + $0x78] sm:$0xff]
    %v1678 = vld [vmem:[%s18] sm:$0x1]
    %v1680 = vlaneseq
    %v1681 = vshrl.u32 %v1680, 7
    %v1682 = vsub.s32 0, %v1681
    %v1683 = vrot.slane %v1678, %v1682
    %1685 = vmatprep.subr.mxu0 0.0
    %1686 = vmatpush1.msra.mxu0 %v1662
    %1687 = vmatprep.subr.mxu0 0.0
    %1688 = vmatpush1.msra.mxu0 %v1663
    %1689 = vmatprep.subr.mxu0 0.0
    %1690 = vmatpush1.msra.mxu0 %v1664
    %1691 = vmatprep.subr.mxu0 0.0
    %1692 = vmatpush1.msra.mxu0 %v1665
    %1693 = vmatprep.subr.mxu0 0.0
    %1694 = vmatpush1.msra.mxu0 %v1666
    %1695 = vmatprep.subr.mxu0 0.0
    %1696 = vmatpush1.msra.mxu0 %v1667
    %1697 = vmatprep.subr.mxu0 0.0
    %1698 = vmatpush1.msra.mxu0 %v1668
    %1699 = vmatprep.subr.mxu0 0.0
    %1700 = vmatpush1.msra.mxu0 %v1669
    %1701 = vmatprep.subr.mxu0 0.0
    %1702 = vmatpush1.msra.mxu0 %v1670
    %1703 = vmatprep.subr.mxu0 0.0
    %1704 = vmatpush1.msra.mxu0 %v1671
    %1705 = vmatprep.subr.mxu0 0.0
    %1706 = vmatpush1.msra.mxu0 %v1672
    %1707 = vmatprep.subr.mxu0 0.0
    %1708 = vmatpush1.msra.mxu0 %v1673
    %1709 = vmatprep.subr.mxu0 0.0
    %1710 = vmatpush1.msra.mxu0 %v1674
    %1711 = vmatprep.subr.mxu0 0.0
    %1712 = vmatpush1.msra.mxu0 %v1675
    %1713 = vmatprep.subr.mxu0 0.0
    %1714 = vmatpush1.msra.mxu0 %v1676
    %1715 = vmatprep.subr.mxu0 0.0
    %1716 = vmatpush1.msra.mxu0 %v1677
    %1717 = vmatprep.subr.mxu0 0.0
    %1718 = vmatpush1.msra.mxu0 0.0
    %1719 = vmatprep.subr.mxu0 0.0
    %1720 = vmatpush1.msra.mxu0 0.0
    %1721 = vmatprep.subr.mxu0 0.0
    %1722 = vmatpush1.msra.mxu0 0.0
    %1723 = vmatprep.subr.mxu0 0.0
    %1724 = vmatpush1.msra.mxu0 0.0
    %1725 = vmatprep.subr.mxu0 0.0
    %1726 = vmatpush1.msra.mxu0 0.0
    %1727 = vmatprep.subr.mxu0 0.0
    %1728 = vmatpush1.msra.mxu0 0.0
    %1729 = vmatprep.subr.mxu0 0.0
    %1730 = vmatpush1.msra.mxu0 0.0
    %1731 = vmatprep.subr.mxu0 0.0
    %1732 = vmatpush1.msra.mxu0 0.0
    %1733 = vmatprep.subr.mxu0 0.0
    %1734 = vmatpush1.msra.mxu0 0.0
    %1735 = vmatprep.subr.mxu0 0.0
    %1736 = vmatpush1.msra.mxu0 0.0
    %1737 = vmatprep.subr.mxu0 0.0
    %1738 = vmatpush1.msra.mxu0 0.0
    %1739 = vmatprep.subr.mxu0 0.0
    %1740 = vmatpush1.msra.mxu0 0.0
    %1741 = vmatprep.subr.mxu0 0.0
    %1742 = vmatpush1.msra.mxu0 0.0
    %1743 = vmatprep.subr.mxu0 0.0
    %1744 = vmatpush1.msra.mxu0 0.0
    %1745 = vmatprep.subr.mxu0 0.0
    %1746 = vmatpush1.msra.mxu0 0.0
    %1747 = vmatprep.subr.mxu0 0.0
    %1748 = vmatpush1.msra.mxu0 0.0
    %1749 = vmatprep.mubr.f32.mxu0 0.0
    %1750 = vmatmul.mubr.f32.gmra.mrb[0].mxu0 %v1661
    %v1751 = vpop.f32.mrb[0].mxu0
    %v1752 = vadd.f32 %v1683, %v1751
    %v1753 = vpop.f32.mrb[0].mxu0
    %1754 = vdwg.mxu0
    %v1755 = vlaneseq
    %v1756 = vand.u32 %v1755, 127
    %vm1757 = vcmp.lt.s32.totalorder %v1756, 8
    %v1758 = vsel %vm1757, 1, 0
    %vm1759 = vcmp.eq.s32.totalorder %v1758, 1
    %v1760 = vsel %vm1759, %v1752, -1e+30
    %v1761 = vsel %vm534, %v1760, -inf
    %1762 = vmax.xlane.f32.xlu0 %v1761
    %v1763 = vpop.xlane.xlu0 %1762
    %v1764 = vsub.f32 %v1760, %v1763
    %v1765 = vmul.f32 %v1764, 1.442695
    %v1766 = vpow.pop %v1765
    %v1767 = vsel %vm1759, %v1766, 0.0
    %v1768 = vsel %vm534, %v1767, 0.0
    %1769 = vadd.xlane.f32.xlu0 %v1768
    %v1770 = vpop.xlane.xlu0 %1769
    %v1771 = vrcp.pop %v1770
    %v1772 = vmul.f32 %v1767, %v1771
    %1773 = vst [vmem:[#allocation2] sm:$0x3] %v1772
    // Predicated region
    $region78: #{mysimplenet_forward.1} parent=1 // pred_check
      _
    $region79: #{mysimplenet_forward.1} parent=1 // pred_check_branch
      %1775 = sbr.rel (0) target = $region81
    $region80: #{mysimplenet_forward.1} parent=1 // pred_region
      %s1777 = ssub.s32 32, 32
      %1778 = vsyncadd [#allocation3], %s1777
      %s1780 = sshll.u32 [#allocation2], 4
      %s1781 = int_to_ptr.vmem [resolvable:$true] %s1780
      %1783 = dma.vmem_to_hbm [thread:$0]  %s1781, 32, %s19, [#allocation3]
    $region81: #{mysimplenet_forward.1} parent=1 // pred_fallthru
      _
    // Predicated region
    $region82: #{mysimplenet_forward.1} parent=1 // pred_check
      _
    $region83: #{mysimplenet_forward.1} parent=1 // pred_check_branch
      %1785 = sbr.rel (0) target = $region85
    $region84: #{mysimplenet_forward.1} parent=1 // pred_region
      %1786 = dma.done [#allocation3], 32
    $region85: #{mysimplenet_forward.1} parent=1 // pred_fallthru
      _
    %1787 = vsyncpa [#allocation3], 1

</llo_original>
